<compile_context>
chip_gen: v7x
topology: tpu7x:2x2x1
jax: 0.10.0
libtpu: 0.0.40
codegen_flags: <defaults>
</compile_context>

<pallas_src>
import jax
import jax.numpy as jnp
from jax.experimental import pallas as pl
from jax.experimental.pallas import tpu as pltpu


def _round_up(n, m):
    return ((n + m - 1) // m) * m


def _pick_chunk(T, max_chunk):
    tq = min(T, max_chunk)
    while T % tq != 0:
        tq -= 1
    return tq


def _pad2(a, rows, cols):
    a = a.astype(jnp.float32)
    return jnp.zeros((rows, cols), jnp.float32).at[: a.shape[0], : a.shape[1]].set(a)


def _pad1(a, n):
    a = a.astype(jnp.float32)
    return jnp.zeros((n,), jnp.float32).at[: a.shape[0]].set(a)


def mdlrnn_recurrence_kernel(xw_ref, m0_ref, wm1_ref, w1m_ref, b1m_ref,
                             h_ref, mem_ref):
    """One grid step == one chunk of TQ time steps of the serial recurrence.

    xw_ref : (TQ, B, Hp)  precomputed x_t @ W01^T + (b01 + bm1)
    mem_ref: (B, Mp)      resident output block carrying the recurrent memory
    h_ref  : (TQ, B, Hp)  hidden activations (output projection applied outside)
    """
    @pl.when(pl.program_id(0) == 0)
    def _():
        mem_ref[...] = m0_ref[...]

    tq = xw_ref.shape[0]

    # Hoist constant operands out of the unrolled time loop.
    wm1 = wm1_ref[...]      # (Mp, Hp)
    w1m = w1m_ref[...]      # (Hp, Mp)
    b1m = b1m_ref[...]      # (1, Mp)

    def step(t, m):
        h = jnp.tanh(xw_ref[t]
                     + jnp.dot(m, wm1, preferred_element_type=jnp.float32))
        h_ref[t] = h.astype(h_ref.dtype)
        return jnp.dot(h, w1m, preferred_element_type=jnp.float32) + b1m

    mem_ref[...] = jax.lax.fori_loop(0, tq, step, mem_ref[...], unroll=True)


def mdlrnn_forward(inputs, params, memory=None, output_layer=None,
                   max_chunk=32):
    """inputs: (B, T, I) float32. Returns (outputs (B, T, O), final memory (B, M))."""
    B, T, I = inputs.shape
    H = params["w01"].shape[0]
    M = params["w1m"].shape[0]
    O = params["w12"].shape[0]

    Hp = _round_up(H, 128)
    Mp = _round_up(M, 128)
    TQ = _pick_chunk(T, max_chunk)

    if memory is None:
        memory = jnp.zeros((B, M), dtype=jnp.float32)

    x_tbi = jnp.transpose(inputs, (1, 0, 2)).astype(jnp.float32)   # (T, B, I)

    # Pre-transposed, lane-padded weights (zero padding is mathematically exact).
    w01t = _pad2(params["w01"].T, I, Hp)            # (I, Hp)
    wm1t = _pad2(params["wm1"].T, Mp, Hp)           # (Mp, Hp)
    w1mt = _pad2(params["w1m"].T, Hp, Mp)           # (Hp, Mp)
    w12t = _pad2(params["w12"].T, Hp, O)            # (Hp, O)
    b_h = _pad1(params["b01"] + params["bm1"], Hp).reshape(1, Hp)   # fused bias
    b1m = _pad1(params["b1m"], Mp).reshape(1, Mp)
    b12 = params["b12"].astype(jnp.float32).reshape(1, O)

    m0 = jnp.zeros((B, Mp), jnp.float32).at[:, :M].set(memory.astype(jnp.float32))

    # Non-recurrent input projection for ALL time steps: one big matmul,
    # off the serial critical path (per perf review).
    xw = jnp.einsum("tbi,ih->tbh", x_tbi, w01t) + b_h               # (T, B, Hp)

    grid_spec = pltpu.PrefetchScalarGridSpec(
        num_scalar_prefetch=0,
        grid=(T // TQ,),
        in_specs=[
            pl.BlockSpec((TQ, B, Hp), lambda c: (c, 0, 0)),   # xw chunk
            pl.BlockSpec((B, Mp), lambda c: (0, 0)),          # initial memory
            pl.BlockSpec((Mp, Hp), lambda c: (0, 0)),         # Wm1^T
            pl.BlockSpec((Hp, Mp), lambda c: (0, 0)),         # W1m^T
            pl.BlockSpec((1, Mp), lambda c: (0, 0)),          # b1m
        ],
        out_specs=[
            pl.BlockSpec((TQ, B, Hp), lambda c: (c, 0, 0)),   # hidden states
            pl.BlockSpec((B, Mp), lambda c: (0, 0)),          # memory (resident)
        ],
    )

    h_tbh, mem_final = pl.pallas_call(
        mdlrnn_recurrence_kernel,
        out_shape=(jax.ShapeDtypeStruct((T, B, Hp), jnp.float32),
                   jax.ShapeDtypeStruct((B, Mp), jnp.float32)),
        grid_spec=grid_spec,
        compiler_params=pltpu.CompilerParams(
            dimension_semantics=("arbitrary",)),   # chunks of the recurrence are serial
    )(xw, m0, wm1t, w1mt, b1m)

    # Non-recurrent output projection: one big lane-dense matmul.
    y_tbo = jnp.einsum("tbh,ho->tbo", h_tbh, w12t) + b12            # (T, B, O)

    outputs = jnp.transpose(y_tbo, (1, 0, 2))                       # (B, T, O)
    mem_final = mem_final[:, :M]

    if output_layer is not None:
        if output_layer == "softmax":
            outputs = jax.nn.softmax(outputs, axis=-1)
        elif output_layer == "normalize":
            outputs = jnp.clip(outputs, 0.0, None)
            outputs = outputs / jnp.maximum(
                jnp.sum(outputs, axis=-1, keepdims=True), 1e-12)
        else:
            raise ValueError(output_layer)
    return outputs, mem_final


def mdlrnn_reference(inputs, params, memory):
    """Pure-JAX reference (lax.scan) mirroring the PyTorch recurrence."""
    x_tbi = jnp.transpose(inputs, (1, 0, 2))

    def step(m, x_t):
        pre = (x_t @ params["w01"].T + params["b01"]
               + m @ params["wm1"].T + params["bm1"])
        h = jnp.tanh(pre)
        y = h @ params["w12"].T + params["b12"]
        m_new = h @ params["w1m"].T + params["b1m"]
        return m_new, y

    m_final, y_tbo = jax.lax.scan(step, memory, x_tbi)
    return jnp.transpose(y_tbo, (1, 0, 2)), m_final


def init_params(key, num_in, hidden, mem, num_out):
    """Deterministic PyTorch-Linear-style init: U(-1/sqrt(fan_in), 1/sqrt(fan_in))."""
    def linear(k, out_f, in_f):
        kw, kb = jax.random.split(k)
        bound = 1.0 / jnp.sqrt(jnp.float32(in_f))
        w = jax.random.uniform(kw, (out_f, in_f), jnp.float32, -bound, bound)
        b = jax.random.uniform(kb, (out_f,), jnp.float32, -bound, bound)
        return w, b

    k1, k2, k3, k4 = jax.random.split(key, 4)
    w01, b01 = linear(k1, hidden, num_in)    # layer 0 -> layer 1
    wm1, bm1 = linear(k2, hidden, mem)       # memory  -> layer 1
    w12, b12 = linear(k3, num_out, hidden)   # layer 1 -> layer 2
    w1m, b1m = linear(k4, mem, hidden)       # layer 1 -> memory
    return dict(w01=w01, b01=b01, wm1=wm1, bm1=bm1,
                w12=w12, b12=b12, w1m=w1m, b1m=b1m)


if __name__ == "__main__":
    B, T, I, H, M, O = 2, 8, 4, 32, 32, 4

    key = jax.random.PRNGKey(0)
    k_params, k_x = jax.random.split(key)
    params = init_params(k_params, I, H, M, O)
    x = jax.random.normal(k_x, (B, T, I), dtype=jnp.float32)
    m0 = jnp.zeros((B, M), dtype=jnp.float32)

    fwd = jax.jit(mdlrnn_forward, static_argnames=("output_layer", "max_chunk"))
    outputs, mem_final = fwd(x, params, m0)
    outputs = jax.block_until_ready(outputs)
    mem_final = jax.block_until_ready(mem_final)

    ref_out, ref_mem = mdlrnn_reference(x, params, m0)
    assert jnp.allclose(outputs, ref_out, atol=1e-4, rtol=1e-4)
    assert jnp.allclose(mem_final, ref_mem, atol=1e-4, rtol=1e-4)

    # TODO(synk): arbitrary user-supplied computation graphs (other topologies /
    # per-unit activation mixes) would need kernel generation per graph; this
    # implements the standard 1-hidden-layer tanh MDLRNN instance in f32
    # (bf16 MXU operands would be a further v6e/v7x win at larger H/M).
    print("KERNEL_OK")
</pallas_src>

<mosaic_0001>
module attributes {stable_mosaic.version = 11 : i64} {
  func.func @mdlrnn_recurrence_kernel(%arg0: i32, %arg1: memref<8x2x128xf32, #tpu.memory_space<vmem>>, %arg2: memref<2x128xf32, #tpu.memory_space<vmem>>, %arg3: memref<128x128xf32, #tpu.memory_space<vmem>>, %arg4: memref<128x128xf32, #tpu.memory_space<vmem>>, %arg5: memref<1x128xf32, #tpu.memory_space<vmem>>, %arg6: memref<8x2x128xf32, #tpu.memory_space<vmem>>, %arg7: memref<2x128xf32, #tpu.memory_space<vmem>>) attributes {dimension_semantics = [#tpu.dimension_semantics<arbitrary>], iteration_bounds = array<i64: 1>, scalar_prefetch = 0 : i64, scratch_operands = 0 : i64, tpu.core_type = #tpu.core_type<tc>, window_params = [{transform_indices = @transform_0, window_bounds = array<i64: 8, 2, 128>}, {pipeline_mode = #tpu.pipeline_mode<synchronous>, transform_indices = @transform_1, window_bounds = array<i64: 2, 128>}, {pipeline_mode = #tpu.pipeline_mode<synchronous>, transform_indices = @transform_2, window_bounds = array<i64: 128, 128>}, {pipeline_mode = #tpu.pipeline_mode<synchronous>, transform_indices = @transform_3, window_bounds = array<i64: 128, 128>}, {pipeline_mode = #tpu.pipeline_mode<synchronous>, transform_indices = @transform_4, window_bounds = array<i64: 1, 128>}, {transform_indices = @transform_5, window_bounds = array<i64: 8, 2, 128>}, {pipeline_mode = #tpu.pipeline_mode<synchronous>, transform_indices = @transform_6, window_bounds = array<i64: 2, 128>}]} {
    %c0_i32 = arith.constant 0 : i32
    %0 = arith.cmpi eq, %arg0, %c0_i32 : i32
    %1 = arith.extui %0 : i1 to i32
    %c0_i32_0 = arith.constant 0 : i32
    %2 = arith.cmpi ne, %1, %c0_i32_0 : i32
    scf.if %2 {
      %c0_58 = arith.constant 0 : index
      %c0_59 = arith.constant 0 : index
      %112 = vector.load %arg2[%c0_58, %c0_59] : memref<2x128xf32, #tpu.memory_space<vmem>>, vector<2x128xf32>
      %c0_60 = arith.constant 0 : index
      %c0_61 = arith.constant 0 : index
      %113 = vector.load %arg7[%c0_60, %c0_61] : memref<2x128xf32, #tpu.memory_space<vmem>>, vector<2x128xf32>
      tpu.vector_store %arg7[%c0_60, %c0_61], %112 {strides = array<i32>} : memref<2x128xf32, #tpu.memory_space<vmem>>, vector<2x128xf32>,
    } else {
    }
    %c0 = arith.constant 0 : index
    %c0_1 = arith.constant 0 : index
    %3 = vector.load %arg3[%c0, %c0_1] : memref<128x128xf32, #tpu.memory_space<vmem>>, vector<128x128xf32>
    %c0_2 = arith.constant 0 : index
    %c0_3 = arith.constant 0 : index
    %4 = vector.load %arg4[%c0_2, %c0_3] : memref<128x128xf32, #tpu.memory_space<vmem>>, vector<128x128xf32>
    %c0_4 = arith.constant 0 : index
    %c0_5 = arith.constant 0 : index
    %5 = vector.load %arg5[%c0_4, %c0_5] : memref<1x128xf32, #tpu.memory_space<vmem>>, vector<1x128xf32>
    %c0_6 = arith.constant 0 : index
    %c0_7 = arith.constant 0 : index
    %6 = vector.load %arg7[%c0_6, %c0_7] : memref<2x128xf32, #tpu.memory_space<vmem>>, vector<2x128xf32>
    %c0_i32_8 = arith.constant 0 : i32
    %7 = arith.index_cast %c0_i32_8 : i32 to index
    %c0_9 = arith.constant 0 : index
    %c0_10 = arith.constant 0 : index
    %8 = vector.load %arg1[%7, %c0_9, %c0_10] : memref<8x2x128xf32, #tpu.memory_space<vmem>>, vector<1x2x128xf32>
    %9 = vector.shape_cast %8 : vector<1x2x128xf32> to vector<2x128xf32>
    %cst = arith.constant dense<0.000000e+00> : vector<2x128xf32>
    %10 = tpu.matmul %6, %3, %cst {dimension_numbers = #tpu.dot_dimension_numbers<[1], [0], [0], [1], [0, 0, 1, 1], [], []>} : vector<2x128xf32>, vector<128x128xf32>, vector<2x128xf32> -> vector<2x128xf32>
    %11 = arith.addf %9, %10 : vector<2x128xf32>
    %12 = math.tanh %11 : vector<2x128xf32>
    %13 = arith.index_cast %c0_i32_8 : i32 to index
    %c0_11 = arith.constant 0 : index
    %c0_12 = arith.constant 0 : index
    %14 = vector.load %arg6[%13, %c0_11, %c0_12] : memref<8x2x128xf32, #tpu.memory_space<vmem>>, vector<1x2x128xf32>
    %15 = vector.shape_cast %14 : vector<1x2x128xf32> to vector<2x128xf32>
    %16 = vector.shape_cast %12 : vector<2x128xf32> to vector<1x2x128xf32>
    tpu.vector_store %arg6[%13, %c0_11, %c0_12], %16 {strides = array<i32>} : memref<8x2x128xf32, #tpu.memory_space<vmem>>, vector<1x2x128xf32>,
    %cst_13 = arith.constant dense<0.000000e+00> : vector<2x128xf32>
    %17 = tpu.matmul %12, %4, %cst_13 {dimension_numbers = #tpu.dot_dimension_numbers<[1], [0], [0], [1], [0, 0, 1, 1], [], []>} : vector<2x128xf32>, vector<128x128xf32>, vector<2x128xf32> -> vector<2x128xf32>
    %18 = vector.broadcast %5 : vector<1x128xf32> to vector<2x128xf32>
    %19 = arith.addf %17, %18 : vector<2x128xf32>
    %c1_i32 = arith.constant 1 : i32
    %20 = arith.index_cast %c1_i32 : i32 to index
    %c0_14 = arith.constant 0 : index
    %c0_15 = arith.constant 0 : index
    %21 = vector.load %arg1[%20, %c0_14, %c0_15] : memref<8x2x128xf32, #tpu.memory_space<vmem>>, vector<1x2x128xf32>
    %22 = vector.shape_cast %21 : vector<1x2x128xf32> to vector<2x128xf32>
    %cst_16 = arith.constant dense<0.000000e+00> : vector<2x128xf32>
    %23 = tpu.matmul %19, %3, %cst_16 {dimension_numbers = #tpu.dot_dimension_numbers<[1], [0], [0], [1], [0, 0, 1, 1], [], []>} : vector<2x128xf32>, vector<128x128xf32>, vector<2x128xf32> -> vector<2x128xf32>
    %24 = arith.addf %22, %23 : vector<2x128xf32>
    %25 = math.tanh %24 : vector<2x128xf32>
    %26 = arith.index_cast %c1_i32 : i32 to index
    %c0_17 = arith.constant 0 : index
    %c0_18 = arith.constant 0 : index
    %27 = vector.load %arg6[%26, %c0_17, %c0_18] : memref<8x2x128xf32, #tpu.memory_space<vmem>>, vector<1x2x128xf32>
    %28 = vector.shape_cast %27 : vector<1x2x128xf32> to vector<2x128xf32>
    %29 = vector.shape_cast %25 : vector<2x128xf32> to vector<1x2x128xf32>
    tpu.vector_store %arg6[%26, %c0_17, %c0_18], %29 {strides = array<i32>} : memref<8x2x128xf32, #tpu.memory_space<vmem>>, vector<1x2x128xf32>,
    %cst_19 = arith.constant dense<0.000000e+00> : vector<2x128xf32>
    %30 = tpu.matmul %25, %4, %cst_19 {dimension_numbers = #tpu.dot_dimension_numbers<[1], [0], [0], [1], [0, 0, 1, 1], [], []>} : vector<2x128xf32>, vector<128x128xf32>, vector<2x128xf32> -> vector<2x128xf32>
    %31 = vector.broadcast %5 : vector<1x128xf32> to vector<2x128xf32>
    %32 = arith.addf %30, %31 : vector<2x128xf32>
    %c2_i32 = arith.constant 2 : i32
    %33 = arith.index_cast %c2_i32 : i32 to index
    %c0_20 = arith.constant 0 : index
    %c0_21 = arith.constant 0 : index
    %34 = vector.load %arg1[%33, %c0_20, %c0_21] : memref<8x2x128xf32, #tpu.memory_space<vmem>>, vector<1x2x128xf32>
    %35 = vector.shape_cast %34 : vector<1x2x128xf32> to vector<2x128xf32>
    %cst_22 = arith.constant dense<0.000000e+00> : vector<2x128xf32>
    %36 = tpu.matmul %32, %3, %cst_22 {dimension_numbers = #tpu.dot_dimension_numbers<[1], [0], [0], [1], [0, 0, 1, 1], [], []>} : vector<2x128xf32>, vector<128x128xf32>, vector<2x128xf32> -> vector<2x128xf32>
    %37 = arith.addf %35, %36 : vector<2x128xf32>
    %38 = math.tanh %37 : vector<2x128xf32>
    %39 = arith.index_cast %c2_i32 : i32 to index
    %c0_23 = arith.constant 0 : index
    %c0_24 = arith.constant 0 : index
    %40 = vector.load %arg6[%39, %c0_23, %c0_24] : memref<8x2x128xf32, #tpu.memory_space<vmem>>, vector<1x2x128xf32>
    %41 = vector.shape_cast %40 : vector<1x2x128xf32> to vector<2x128xf32>
    %42 = vector.shape_cast %38 : vector<2x128xf32> to vector<1x2x128xf32>
    tpu.vector_store %arg6[%39, %c0_23, %c0_24], %42 {strides = array<i32>} : memref<8x2x128xf32, #tpu.memory_space<vmem>>, vector<1x2x128xf32>,
    %cst_25 = arith.constant dense<0.000000e+00> : vector<2x128xf32>
    %43 = tpu.matmul %38, %4, %cst_25 {dimension_numbers = #tpu.dot_dimension_numbers<[1], [0], [0], [1], [0, 0, 1, 1], [], []>} : vector<2x128xf32>, vector<128x128xf32>, vector<2x128xf32> -> vector<2x128xf32>
    %44 = vector.broadcast %5 : vector<1x128xf32> to vector<2x128xf32>
    %45 = arith.addf %43, %44 : vector<2x128xf32>
    %c3_i32 = arith.constant 3 : i32
    %46 = arith.index_cast %c3_i32 : i32 to index
    %c0_26 = arith.constant 0 : index
    %c0_27 = arith.constant 0 : index
    %47 = vector.load %arg1[%46, %c0_26, %c0_27] : memref<8x2x128xf32, #tpu.memory_space<vmem>>, vector<1x2x128xf32>
    %48 = vector.shape_cast %47 : vector<1x2x128xf32> to vector<2x128xf32>
    %cst_28 = arith.constant dense<0.000000e+00> : vector<2x128xf32>
    %49 = tpu.matmul %45, %3, %cst_28 {dimension_numbers = #tpu.dot_dimension_numbers<[1], [0], [0], [1], [0, 0, 1, 1], [], []>} : vector<2x128xf32>, vector<128x128xf32>, vector<2x128xf32> -> vector<2x128xf32>
    %50 = arith.addf %48, %49 : vector<2x128xf32>
    %51 = math.tanh %50 : vector<2x128xf32>
    %52 = arith.index_cast %c3_i32 : i32 to index
    %c0_29 = arith.constant 0 : index
    %c0_30 = arith.constant 0 : index
    %53 = vector.load %arg6[%52, %c0_29, %c0_30] : memref<8x2x128xf32, #tpu.memory_space<vmem>>, vector<1x2x128xf32>
    %54 = vector.shape_cast %53 : vector<1x2x128xf32> to vector<2x128xf32>
    %55 = vector.shape_cast %51 : vector<2x128xf32> to vector<1x2x128xf32>
    tpu.vector_store %arg6[%52, %c0_29, %c0_30], %55 {strides = array<i32>} : memref<8x2x128xf32, #tpu.memory_space<vmem>>, vector<1x2x128xf32>,
    %cst_31 = arith.constant dense<0.000000e+00> : vector<2x128xf32>
    %56 = tpu.matmul %51, %4, %cst_31 {dimension_numbers = #tpu.dot_dimension_numbers<[1], [0], [0], [1], [0, 0, 1, 1], [], []>} : vector<2x128xf32>, vector<128x128xf32>, vector<2x128xf32> -> vector<2x128xf32>
    %57 = vector.broadcast %5 : vector<1x128xf32> to vector<2x128xf32>
    %58 = arith.addf %56, %57 : vector<2x128xf32>
    %c4_i32 = arith.constant 4 : i32
    %59 = arith.index_cast %c4_i32 : i32 to index
    %c0_32 = arith.constant 0 : index
    %c0_33 = arith.constant 0 : index
    %60 = vector.load %arg1[%59, %c0_32, %c0_33] : memref<8x2x128xf32, #tpu.memory_space<vmem>>, vector<1x2x128xf32>
    %61 = vector.shape_cast %60 : vector<1x2x128xf32> to vector<2x128xf32>
    %cst_34 = arith.constant dense<0.000000e+00> : vector<2x128xf32>
    %62 = tpu.matmul %58, %3, %cst_34 {dimension_numbers = #tpu.dot_dimension_numbers<[1], [0], [0], [1], [0, 0, 1, 1], [], []>} : vector<2x128xf32>, vector<128x128xf32>, vector<2x128xf32> -> vector<2x128xf32>
    %63 = arith.addf %61, %62 : vector<2x128xf32>
    %64 = math.tanh %63 : vector<2x128xf32>
    %65 = arith.index_cast %c4_i32 : i32 to index
    %c0_35 = arith.constant 0 : index
    %c0_36 = arith.constant 0 : index
    %66 = vector.load %arg6[%65, %c0_35, %c0_36] : memref<8x2x128xf32, #tpu.memory_space<vmem>>, vector<1x2x128xf32>
    %67 = vector.shape_cast %66 : vector<1x2x128xf32> to vector<2x128xf32>
    %68 = vector.shape_cast %64 : vector<2x128xf32> to vector<1x2x128xf32>
    tpu.vector_store %arg6[%65, %c0_35, %c0_36], %68 {strides = array<i32>} : memref<8x2x128xf32, #tpu.memory_space<vmem>>, vector<1x2x128xf32>,
    %cst_37 = arith.constant dense<0.000000e+00> : vector<2x128xf32>
    %69 = tpu.matmul %64, %4, %cst_37 {dimension_numbers = #tpu.dot_dimension_numbers<[1], [0], [0], [1], [0, 0, 1, 1], [], []>} : vector<2x128xf32>, vector<128x128xf32>, vector<2x128xf32> -> vector<2x128xf32>
    %70 = vector.broadcast %5 : vector<1x128xf32> to vector<2x128xf32>
    %71 = arith.addf %69, %70 : vector<2x128xf32>
    %c5_i32 = arith.constant 5 : i32
    %72 = arith.index_cast %c5_i32 : i32 to index
    %c0_38 = arith.constant 0 : index
    %c0_39 = arith.constant 0 : index
    %73 = vector.load %arg1[%72, %c0_38, %c0_39] : memref<8x2x128xf32, #tpu.memory_space<vmem>>, vector<1x2x128xf32>
    %74 = vector.shape_cast %73 : vector<1x2x128xf32> to vector<2x128xf32>
    %cst_40 = arith.constant dense<0.000000e+00> : vector<2x128xf32>
    %75 = tpu.matmul %71, %3, %cst_40 {dimension_numbers = #tpu.dot_dimension_numbers<[1], [0], [0], [1], [0, 0, 1, 1], [], []>} : vector<2x128xf32>, vector<128x128xf32>, vector<2x128xf32> -> vector<2x128xf32>
    %76 = arith.addf %74, %75 : vector<2x128xf32>
    %77 = math.tanh %76 : vector<2x128xf32>
    %78 = arith.index_cast %c5_i32 : i32 to index
    %c0_41 = arith.constant 0 : index
    %c0_42 = arith.constant 0 : index
    %79 = vector.load %arg6[%78, %c0_41, %c0_42] : memref<8x2x128xf32, #tpu.memory_space<vmem>>, vector<1x2x128xf32>
    %80 = vector.shape_cast %79 : vector<1x2x128xf32> to vector<2x128xf32>
    %81 = vector.shape_cast %77 : vector<2x128xf32> to vector<1x2x128xf32>
    tpu.vector_store %arg6[%78, %c0_41, %c0_42], %81 {strides = array<i32>} : memref<8x2x128xf32, #tpu.memory_space<vmem>>, vector<1x2x128xf32>,
    %cst_43 = arith.constant dense<0.000000e+00> : vector<2x128xf32>
    %82 = tpu.matmul %77, %4, %cst_43 {dimension_numbers = #tpu.dot_dimension_numbers<[1], [0], [0], [1], [0, 0, 1, 1], [], []>} : vector<2x128xf32>, vector<128x128xf32>, vector<2x128xf32> -> vector<2x128xf32>
    %83 = vector.broadcast %5 : vector<1x128xf32> to vector<2x128xf32>
    %84 = arith.addf %82, %83 : vector<2x128xf32>
    %c6_i32 = arith.constant 6 : i32
    %85 = arith.index_cast %c6_i32 : i32 to index
    %c0_44 = arith.constant 0 : index
    %c0_45 = arith.constant 0 : index
    %86 = vector.load %arg1[%85, %c0_44, %c0_45] : memref<8x2x128xf32, #tpu.memory_space<vmem>>, vector<1x2x128xf32>
    %87 = vector.shape_cast %86 : vector<1x2x128xf32> to vector<2x128xf32>
    %cst_46 = arith.constant dense<0.000000e+00> : vector<2x128xf32>
    %88 = tpu.matmul %84, %3, %cst_46 {dimension_numbers = #tpu.dot_dimension_numbers<[1], [0], [0], [1], [0, 0, 1, 1], [], []>} : vector<2x128xf32>, vector<128x128xf32>, vector<2x128xf32> -> vector<2x128xf32>
    %89 = arith.addf %87, %88 : vector<2x128xf32>
    %90 = math.tanh %89 : vector<2x128xf32>
    %91 = arith.index_cast %c6_i32 : i32 to index
    %c0_47 = arith.constant 0 : index
    %c0_48 = arith.constant 0 : index
    %92 = vector.load %arg6[%91, %c0_47, %c0_48] : memref<8x2x128xf32, #tpu.memory_space<vmem>>, vector<1x2x128xf32>
    %93 = vector.shape_cast %92 : vector<1x2x128xf32> to vector<2x128xf32>
    %94 = vector.shape_cast %90 : vector<2x128xf32> to vector<1x2x128xf32>
    tpu.vector_store %arg6[%91, %c0_47, %c0_48], %94 {strides = array<i32>} : memref<8x2x128xf32, #tpu.memory_space<vmem>>, vector<1x2x128xf32>,
    %cst_49 = arith.constant dense<0.000000e+00> : vector<2x128xf32>
    %95 = tpu.matmul %90, %4, %cst_49 {dimension_numbers = #tpu.dot_dimension_numbers<[1], [0], [0], [1], [0, 0, 1, 1], [], []>} : vector<2x128xf32>, vector<128x128xf32>, vector<2x128xf32> -> vector<2x128xf32>
    %96 = vector.broadcast %5 : vector<1x128xf32> to vector<2x128xf32>
    %97 = arith.addf %95, %96 : vector<2x128xf32>
    %c7_i32 = arith.constant 7 : i32
    %98 = arith.index_cast %c7_i32 : i32 to index
    %c0_50 = arith.constant 0 : index
    %c0_51 = arith.constant 0 : index
    %99 = vector.load %arg1[%98, %c0_50, %c0_51] : memref<8x2x128xf32, #tpu.memory_space<vmem>>, vector<1x2x128xf32>
    %100 = vector.shape_cast %99 : vector<1x2x128xf32> to vector<2x128xf32>
    %cst_52 = arith.constant dense<0.000000e+00> : vector<2x128xf32>
    %101 = tpu.matmul %97, %3, %cst_52 {dimension_numbers = #tpu.dot_dimension_numbers<[1], [0], [0], [1], [0, 0, 1, 1], [], []>} : vector<2x128xf32>, vector<128x128xf32>, vector<2x128xf32> -> vector<2x128xf32>
    %102 = arith.addf %100, %101 : vector<2x128xf32>
    %103 = math.tanh %102 : vector<2x128xf32>
    %104 = arith.index_cast %c7_i32 : i32 to index
    %c0_53 = arith.constant 0 : index
    %c0_54 = arith.constant 0 : index
    %105 = vector.load %arg6[%104, %c0_53, %c0_54] : memref<8x2x128xf32, #tpu.memory_space<vmem>>, vector<1x2x128xf32>
    %106 = vector.shape_cast %105 : vector<1x2x128xf32> to vector<2x128xf32>
    %107 = vector.shape_cast %103 : vector<2x128xf32> to vector<1x2x128xf32>
    tpu.vector_store %arg6[%104, %c0_53, %c0_54], %107 {strides = array<i32>} : memref<8x2x128xf32, #tpu.memory_space<vmem>>, vector<1x2x128xf32>,
    %cst_55 = arith.constant dense<0.000000e+00> : vector<2x128xf32>
    %108 = tpu.matmul %103, %4, %cst_55 {dimension_numbers = #tpu.dot_dimension_numbers<[1], [0], [0], [1], [0, 0, 1, 1], [], []>} : vector<2x128xf32>, vector<128x128xf32>, vector<2x128xf32> -> vector<2x128xf32>
    %109 = vector.broadcast %5 : vector<1x128xf32> to vector<2x128xf32>
    %110 = arith.addf %108, %109 : vector<2x128xf32>
    %c8_i32 = arith.constant 8 : i32
    %c0_56 = arith.constant 0 : index
    %c0_57 = arith.constant 0 : index
    %111 = vector.load %arg7[%c0_56, %c0_57] : memref<2x128xf32, #tpu.memory_space<vmem>>, vector<2x128xf32>
    tpu.vector_store %arg7[%c0_56, %c0_57], %110 {strides = array<i32>} : memref<2x128xf32, #tpu.memory_space<vmem>>, vector<2x128xf32>,
    return
  }
  func.func @transform_0(%arg0: i32) -> (i32, i32, i32) {
    %c0_i32 = arith.constant 0 : i32
    %c0_i32_0 = arith.constant 0 : i32
    %c0_i32_1 = arith.constant 0 : i32
    return %arg0, %c0_i32, %c0_i32_0 : i32, i32, i32
  }
  func.func @transform_1(%arg0: i32) -> (i32, i32) {
    %c0_i32 = arith.constant 0 : i32
    %c0_i32_0 = arith.constant 0 : i32
    %c0_i32_1 = arith.constant 0 : i32
    return %c0_i32, %c0_i32_0 : i32, i32
  }
  func.func @transform_2(%arg0: i32) -> (i32, i32) {
    %c0_i32 = arith.constant 0 : i32
    %c0_i32_0 = arith.constant 0 : i32
    %c0_i32_1 = arith.constant 0 : i32
    return %c0_i32, %c0_i32_0 : i32, i32
  }
  func.func @transform_3(%arg0: i32) -> (i32, i32) {
    %c0_i32 = arith.constant 0 : i32
    %c0_i32_0 = arith.constant 0 : i32
    %c0_i32_1 = arith.constant 0 : i32
    return %c0_i32, %c0_i32_0 : i32, i32
  }
  func.func @transform_4(%arg0: i32) -> (i32, i32) {
    %c0_i32 = arith.constant 0 : i32
    %c0_i32_0 = arith.constant 0 : i32
    %c0_i32_1 = arith.constant 0 : i32
    return %c0_i32, %c0_i32_0 : i32, i32
  }
  func.func @transform_5(%arg0: i32) -> (i32, i32, i32) {
    %c0_i32 = arith.constant 0 : i32
    %c0_i32_0 = arith.constant 0 : i32
    %c0_i32_1 = arith.constant 0 : i32
    return %arg0, %c0_i32, %c0_i32_0 : i32, i32, i32
  }
  func.func @transform_6(%arg0: i32) -> (i32, i32) {
    %c0_i32 = arith.constant 0 : i32
    %c0_i32_0 = arith.constant 0 : i32
    %c0_i32_1 = arith.constant 0 : i32
    return %c0_i32, %c0_i32_0 : i32, i32
  }
}

</mosaic_0001>

<llo_original>
// kernel: mdlrnn_forward.1
$region0: #{mdlrnn_forward.1}
  #allocation0 [shape = 'u32[]', space=smem, size = 0x4, offset = 0x4, fixed_abs, tag = 'smem constant byte address 0x4 - core index']
  #allocation1 [shape = 'u32[144,128]{1,0:T(1,128)}', space=vmem, size = 0x12000, scoped, tag = 'internal scratch']
  %s0 = inlined_call_operand.vmem [shape: f32[8,2,128], index: 0, kind: input, shape index: {}]
  %s1 = inlined_call_operand.vmem [shape: f32[2,128], index: 1, kind: input, shape index: {}]
  %s2 = inlined_call_operand.vmem [shape: f32[128,128], index: 2, kind: input, shape index: {}]
  %s3 = inlined_call_operand.vmem [shape: f32[128,128], index: 3, kind: input, shape index: {}]
  %s4 = inlined_call_operand.vmem [shape: f32[1,128], index: 4, kind: input, shape index: {}]
  %s5 = inlined_call_operand.vmem [shape: f32[8,2,128], index: 5, kind: output, shape index: {0}]
  %s6 = inlined_call_operand.hbm [shape: f32[2,128], index: 6, kind: output, shape index: {1}]
  %7 = xla_tuple %s5, %s6
  %s8 = sld [smem:[#allocation0]]
  $region42: #{mdlrnn_forward.1} parent=0
    _
  %s10 = ssub.s32 1, %s8
  %s11 = scalar_select 0, %s10, %s8
  $region1: #{mdlrnn_forward.1} parent=0
    #allocation2 [shape = 'u8[1024]{0}', space=vmem, size = 0x400, scoped, tag = 'output window, operand 1, single buffered']
    #allocation3 [shape = 's32[1]{0}', space=sflag, size = 0x4, scoped, tag = 'scoped memory for mdlrnn_forward.1']
    %12 = vsyncpa [#allocation3], 0
    // Predicated region
    $region2: #{mdlrnn_forward.1} parent=1 // pred_check
      _
    $region3: #{mdlrnn_forward.1} parent=1 // pred_check_branch
      %14 = sbr.rel (0) target = $region5
    $region4: #{mdlrnn_forward.1} parent=1 // pred_region
      _
    $region5: #{mdlrnn_forward.1} parent=1 // pred_fallthru
      _
    // Predicated region
    $region6: #{mdlrnn_forward.1} parent=1 // pred_check
      _
    $region7: #{mdlrnn_forward.1} parent=1 // pred_check_branch
      %16 = sbr.rel (0) target = $region9
    $region8: #{mdlrnn_forward.1} parent=1 // pred_region
      _
    $region9: #{mdlrnn_forward.1} parent=1 // pred_fallthru
      _
    // Predicated region
    $region10: #{mdlrnn_forward.1} parent=1 // pred_check
      _
    $region11: #{mdlrnn_forward.1} parent=1 // pred_check_branch
      %18 = sbr.rel (0) target = $region13
    $region12: #{mdlrnn_forward.1} parent=1 // pred_region
      _
    $region13: #{mdlrnn_forward.1} parent=1 // pred_fallthru
      _
    // Predicated region
    $region14: #{mdlrnn_forward.1} parent=1 // pred_check
      _
    $region15: #{mdlrnn_forward.1} parent=1 // pred_check_branch
      %20 = sbr.rel (0) target = $region17
    $region16: #{mdlrnn_forward.1} parent=1 // pred_region
      _
    $region17: #{mdlrnn_forward.1} parent=1 // pred_fallthru
      _
    // Predicated region
    $region18: #{mdlrnn_forward.1} parent=1 // pred_check
      _
    $region19: #{mdlrnn_forward.1} parent=1 // pred_check_branch
      %22 = sbr.rel (0) target = $region21
    $region20: #{mdlrnn_forward.1} parent=1 // pred_region
      _
    $region21: #{mdlrnn_forward.1} parent=1 // pred_fallthru
      _
    %p23 = scmp.eq.s32.totalorder 0, 0
    // Predicated region
    $region22: #{mdlrnn_forward.1} parent=1 // pred_check
      %p24 = pneg %p23
    $region23: #{mdlrnn_forward.1} parent=1 // pred_check_branch
      %26 = sbr.rel (%p24) target = $region25
    $region24: #{mdlrnn_forward.1} parent=1 // pred_region
      %v27 = vld [vmem:[%s1] sm:$0x3]
      %28 = vst [vmem:[#allocation2] sm:$0x3] %v27
    $region25: #{mdlrnn_forward.1} parent=1 // pred_fallthru
      _
    %v29 = vld [vmem:[%s2] sm:$0xff]
    %v30 = vld [vmem:[%s2 + $0x8] sm:$0xff]
    %v31 = vld [vmem:[%s2 + $0x10] sm:$0xff]
    %v32 = vld [vmem:[%s2 + $0x18] sm:$0xff]
    %v33 = vld [vmem:[%s2 + $0x20] sm:$0xff]
    %v34 = vld [vmem:[%s2 + $0x28] sm:$0xff]
    %v35 = vld [vmem:[%s2 + $0x30] sm:$0xff]
    %v36 = vld [vmem:[%s2 + $0x38] sm:$0xff]
    %v37 = vld [vmem:[%s2 + $0x40] sm:$0xff]
    %v38 = vld [vmem:[%s2 + $0x48] sm:$0xff]
    %v39 = vld [vmem:[%s2 + $0x50] sm:$0xff]
    %v40 = vld [vmem:[%s2 + $0x58] sm:$0xff]
    %v41 = vld [vmem:[%s2 + $0x60] sm:$0xff]
    %v42 = vld [vmem:[%s2 + $0x68] sm:$0xff]
    %v43 = vld [vmem:[%s2 + $0x70] sm:$0xff]
    %v44 = vld [vmem:[%s2 + $0x78] sm:$0xff]
    %v45 = vld [vmem:[%s3] sm:$0xff]
    %v46 = vld [vmem:[%s3 + $0x8] sm:$0xff]
    %v47 = vld [vmem:[%s3 + $0x10] sm:$0xff]
    %v48 = vld [vmem:[%s3 + $0x18] sm:$0xff]
    %v49 = vld [vmem:[%s3 + $0x20] sm:$0xff]
    %v50 = vld [vmem:[%s3 + $0x28] sm:$0xff]
    %v51 = vld [vmem:[%s3 + $0x30] sm:$0xff]
    %v52 = vld [vmem:[%s3 + $0x38] sm:$0xff]
    %v53 = vld [vmem:[%s3 + $0x40] sm:$0xff]
    %v54 = vld [vmem:[%s3 + $0x48] sm:$0xff]
    %v55 = vld [vmem:[%s3 + $0x50] sm:$0xff]
    %v56 = vld [vmem:[%s3 + $0x58] sm:$0xff]
    %v57 = vld [vmem:[%s3 + $0x60] sm:$0xff]
    %v58 = vld [vmem:[%s3 + $0x68] sm:$0xff]
    %v59 = vld [vmem:[%s3 + $0x70] sm:$0xff]
    %v60 = vld [vmem:[%s3 + $0x78] sm:$0xff]
    %v61 = vld [vmem:[%s4] sm:$0x1]
    %v62 = vld [vmem:[#allocation2] sm:$0x3]
    %v63 = vld [vmem:[%s0] sm:$0x3]
    %64 = vmatprep.subr.mxu0 0.0
    %65 = vmatpush1.msra.mxu0 %v29
    %66 = vmatprep.subr.mxu0 0.0
    %67 = vmatpush1.msra.mxu0 %v30
    %68 = vmatprep.subr.mxu0 0.0
    %69 = vmatpush1.msra.mxu0 %v31
    %70 = vmatprep.subr.mxu0 0.0
    %71 = vmatpush1.msra.mxu0 %v32
    %72 = vmatprep.subr.mxu0 0.0
    %73 = vmatpush1.msra.mxu0 %v33
    %74 = vmatprep.subr.mxu0 0.0
    %75 = vmatpush1.msra.mxu0 %v34
    %76 = vmatprep.subr.mxu0 0.0
    %77 = vmatpush1.msra.mxu0 %v35
    %78 = vmatprep.subr.mxu0 0.0
    %79 = vmatpush1.msra.mxu0 %v36
    %80 = vmatprep.subr.mxu0 0.0
    %81 = vmatpush1.msra.mxu0 %v37
    %82 = vmatprep.subr.mxu0 0.0
    %83 = vmatpush1.msra.mxu0 %v38
    %84 = vmatprep.subr.mxu0 0.0
    %85 = vmatpush1.msra.mxu0 %v39
    %86 = vmatprep.subr.mxu0 0.0
    %87 = vmatpush1.msra.mxu0 %v40
    %88 = vmatprep.subr.mxu0 0.0
    %89 = vmatpush1.msra.mxu0 %v41
    %90 = vmatprep.subr.mxu0 0.0
    %91 = vmatpush1.msra.mxu0 %v42
    %92 = vmatprep.subr.mxu0 0.0
    %93 = vmatpush1.msra.mxu0 %v43
    %94 = vmatprep.subr.mxu0 0.0
    %95 = vmatpush1.msra.mxu0 %v44
    %96 = vmatprep.subr.mxu0 0.0
    %97 = vmatpush1.msra.mxu0 0.0
    %98 = vmatprep.subr.mxu0 0.0
    %99 = vmatpush1.msra.mxu0 0.0
    %100 = vmatprep.subr.mxu0 0.0
    %101 = vmatpush1.msra.mxu0 0.0
    %102 = vmatprep.subr.mxu0 0.0
    %103 = vmatpush1.msra.mxu0 0.0
    %104 = vmatprep.subr.mxu0 0.0
    %105 = vmatpush1.msra.mxu0 0.0
    %106 = vmatprep.subr.mxu0 0.0
    %107 = vmatpush1.msra.mxu0 0.0
    %108 = vmatprep.subr.mxu0 0.0
    %109 = vmatpush1.msra.mxu0 0.0
    %110 = vmatprep.subr.mxu0 0.0
    %111 = vmatpush1.msra.mxu0 0.0
    %112 = vmatprep.subr.mxu0 0.0
    %113 = vmatpush1.msra.mxu0 0.0
    %114 = vmatprep.subr.mxu0 0.0
    %115 = vmatpush1.msra.mxu0 0.0
    %116 = vmatprep.subr.mxu0 0.0
    %117 = vmatpush1.msra.mxu0 0.0
    %118 = vmatprep.subr.mxu0 0.0
    %119 = vmatpush1.msra.mxu0 0.0
    %120 = vmatprep.subr.mxu0 0.0
    %121 = vmatpush1.msra.mxu0 0.0
    %122 = vmatprep.subr.mxu0 0.0
    %123 = vmatpush1.msra.mxu0 0.0
    %124 = vmatprep.subr.mxu0 0.0
    %125 = vmatpush1.msra.mxu0 0.0
    %126 = vmatprep.subr.mxu0 0.0
    %127 = vmatpush1.msra.mxu0 0.0
    %128 = vmatprep.mubr.f32.mxu0 0.0
    %129 = vmatmul.mubr.f32.gmra.mrb[0].mxu0 %v62
    %v130 = vpop.f32.mrb[0].mxu0
    %v131 = vadd.f32 0.0, %v130
    %v132 = vpop.f32.mrb[0].mxu0
    %133 = vdwg.mxu0
    %v134 = vadd.f32 %v63, %v131
    %v135 = vtanh.pop %v134
    %136 = vst [vmem:[%s5] sm:$0x3] %v135
    %v138 = vlaneseq
    %v139 = vshrl.u32 %v138, 7
    %v140 = vsub.s32 0, %v139
    %v141 = vrot.slane %v61, %v140
    %143 = vmatprep.subr.mxu0 0.0
    %144 = vmatpush1.msra.mxu0 %v45
    %145 = vmatprep.subr.mxu0 0.0
    %146 = vmatpush1.msra.mxu0 %v46
    %147 = vmatprep.subr.mxu0 0.0
    %148 = vmatpush1.msra.mxu0 %v47
    %149 = vmatprep.subr.mxu0 0.0
    %150 = vmatpush1.msra.mxu0 %v48
    %151 = vmatprep.subr.mxu0 0.0
    %152 = vmatpush1.msra.mxu0 %v49
    %153 = vmatprep.subr.mxu0 0.0
    %154 = vmatpush1.msra.mxu0 %v50
    %155 = vmatprep.subr.mxu0 0.0
    %156 = vmatpush1.msra.mxu0 %v51
    %157 = vmatprep.subr.mxu0 0.0
    %158 = vmatpush1.msra.mxu0 %v52
    %159 = vmatprep.subr.mxu0 0.0
    %160 = vmatpush1.msra.mxu0 %v53
    %161 = vmatprep.subr.mxu0 0.0
    %162 = vmatpush1.msra.mxu0 %v54
    %163 = vmatprep.subr.mxu0 0.0
    %164 = vmatpush1.msra.mxu0 %v55
    %165 = vmatprep.subr.mxu0 0.0
    %166 = vmatpush1.msra.mxu0 %v56
    %167 = vmatprep.subr.mxu0 0.0
    %168 = vmatpush1.msra.mxu0 %v57
    %169 = vmatprep.subr.mxu0 0.0
    %170 = vmatpush1.msra.mxu0 %v58
    %171 = vmatprep.subr.mxu0 0.0
    %172 = vmatpush1.msra.mxu0 %v59
    %173 = vmatprep.subr.mxu0 0.0
    %174 = vmatpush1.msra.mxu0 %v60
    %175 = vmatprep.subr.mxu0 0.0
    %176 = vmatpush1.msra.mxu0 0.0
    %177 = vmatprep.subr.mxu0 0.0
    %178 = vmatpush1.msra.mxu0 0.0
    %179 = vmatprep.subr.mxu0 0.0
    %180 = vmatpush1.msra.mxu0 0.0
    %181 = vmatprep.subr.mxu0 0.0
    %182 = vmatpush1.msra.mxu0 0.0
    %183 = vmatprep.subr.mxu0 0.0
    %184 = vmatpush1.msra.mxu0 0.0
    %185 = vmatprep.subr.mxu0 0.0
    %186 = vmatpush1.msra.mxu0 0.0
    %187 = vmatprep.subr.mxu0 0.0
    %188 = vmatpush1.msra.mxu0 0.0
    %189 = vmatprep.subr.mxu0 0.0
    %190 = vmatpush1.msra.mxu0 0.0
    %191 = vmatprep.subr.mxu0 0.0
    %192 = vmatpush1.msra.mxu0 0.0
    %193 = vmatprep.subr.mxu0 0.0
    %194 = vmatpush1.msra.mxu0 0.0
    %195 = vmatprep.subr.mxu0 0.0
    %196 = vmatpush1.msra.mxu0 0.0
    %197 = vmatprep.subr.mxu0 0.0
    %198 = vmatpush1.msra.mxu0 0.0
    %199 = vmatprep.subr.mxu0 0.0
    %200 = vmatpush1.msra.mxu0 0.0
    %201 = vmatprep.subr.mxu0 0.0
    %202 = vmatpush1.msra.mxu0 0.0
    %203 = vmatprep.subr.mxu0 0.0
    %204 = vmatpush1.msra.mxu0 0.0
    %205 = vmatprep.subr.mxu0 0.0
    %206 = vmatpush1.msra.mxu0 0.0
    %207 = vmatprep.mubr.f32.mxu0 0.0
    %208 = vmatmul.mubr.f32.gmra.mrb[0].mxu0 %v135
    %v209 = vpop.f32.mrb[0].mxu0
    %v210 = vadd.f32 %v141, %v209
    %v211 = vpop.f32.mrb[0].mxu0
    %212 = vdwg.mxu0
    %s213 = scalar_lea.vmem %s0, 2
    %v214 = vld [vmem:[%s213] sm:$0x3]
    %215 = vmatprep.subr.mxu0 0.0
    %216 = vmatpush1.msra.mxu0 %v29
    %217 = vmatprep.subr.mxu0 0.0
    %218 = vmatpush1.msra.mxu0 %v30
    %219 = vmatprep.subr.mxu0 0.0
    %220 = vmatpush1.msra.mxu0 %v31
    %221 = vmatprep.subr.mxu0 0.0
    %222 = vmatpush1.msra.mxu0 %v32
    %223 = vmatprep.subr.mxu0 0.0
    %224 = vmatpush1.msra.mxu0 %v33
    %225 = vmatprep.subr.mxu0 0.0
    %226 = vmatpush1.msra.mxu0 %v34
    %227 = vmatprep.subr.mxu0 0.0
    %228 = vmatpush1.msra.mxu0 %v35
    %229 = vmatprep.subr.mxu0 0.0
    %230 = vmatpush1.msra.mxu0 %v36
    %231 = vmatprep.subr.mxu0 0.0
    %232 = vmatpush1.msra.mxu0 %v37
    %233 = vmatprep.subr.mxu0 0.0
    %234 = vmatpush1.msra.mxu0 %v38
    %235 = vmatprep.subr.mxu0 0.0
    %236 = vmatpush1.msra.mxu0 %v39
    %237 = vmatprep.subr.mxu0 0.0
    %238 = vmatpush1.msra.mxu0 %v40
    %239 = vmatprep.subr.mxu0 0.0
    %240 = vmatpush1.msra.mxu0 %v41
    %241 = vmatprep.subr.mxu0 0.0
    %242 = vmatpush1.msra.mxu0 %v42
    %243 = vmatprep.subr.mxu0 0.0
    %244 = vmatpush1.msra.mxu0 %v43
    %245 = vmatprep.subr.mxu0 0.0
    %246 = vmatpush1.msra.mxu0 %v44
    %247 = vmatprep.subr.mxu0 0.0
    %248 = vmatpush1.msra.mxu0 0.0
    %249 = vmatprep.subr.mxu0 0.0
    %250 = vmatpush1.msra.mxu0 0.0
    %251 = vmatprep.subr.mxu0 0.0
    %252 = vmatpush1.msra.mxu0 0.0
    %253 = vmatprep.subr.mxu0 0.0
    %254 = vmatpush1.msra.mxu0 0.0
    %255 = vmatprep.subr.mxu0 0.0
    %256 = vmatpush1.msra.mxu0 0.0
    %257 = vmatprep.subr.mxu0 0.0
    %258 = vmatpush1.msra.mxu0 0.0
    %259 = vmatprep.subr.mxu0 0.0
    %260 = vmatpush1.msra.mxu0 0.0
    %261 = vmatprep.subr.mxu0 0.0
    %262 = vmatpush1.msra.mxu0 0.0
    %263 = vmatprep.subr.mxu0 0.0
    %264 = vmatpush1.msra.mxu0 0.0
    %265 = vmatprep.subr.mxu0 0.0
    %266 = vmatpush1.msra.mxu0 0.0
    %267 = vmatprep.subr.mxu0 0.0
    %268 = vmatpush1.msra.mxu0 0.0
    %269 = vmatprep.subr.mxu0 0.0
    %270 = vmatpush1.msra.mxu0 0.0
    %271 = vmatprep.subr.mxu0 0.0
    %272 = vmatpush1.msra.mxu0 0.0
    %273 = vmatprep.subr.mxu0 0.0
    %274 = vmatpush1.msra.mxu0 0.0
    %275 = vmatprep.subr.mxu0 0.0
    %276 = vmatpush1.msra.mxu0 0.0
    %277 = vmatprep.subr.mxu0 0.0
    %278 = vmatpush1.msra.mxu0 0.0
    %279 = vmatprep.mubr.f32.mxu0 0.0
    %280 = vmatmul.mubr.f32.gmra.mrb[0].mxu0 %v210
    %v281 = vpop.f32.mrb[0].mxu0
    %v282 = vadd.f32 0.0, %v281
    %v283 = vpop.f32.mrb[0].mxu0
    %284 = vdwg.mxu0
    %v285 = vadd.f32 %v214, %v282
    %v286 = vtanh.pop %v285
    %s287 = scalar_lea.vmem %s5, 2
    %288 = vst [vmem:[%s287] sm:$0x3] %v286
    %289 = vmatprep.subr.mxu0 0.0
    %290 = vmatpush1.msra.mxu0 %v45
    %291 = vmatprep.subr.mxu0 0.0
    %292 = vmatpush1.msra.mxu0 %v46
    %293 = vmatprep.subr.mxu0 0.0
    %294 = vmatpush1.msra.mxu0 %v47
    %295 = vmatprep.subr.mxu0 0.0
    %296 = vmatpush1.msra.mxu0 %v48
    %297 = vmatprep.subr.mxu0 0.0
    %298 = vmatpush1.msra.mxu0 %v49
    %299 = vmatprep.subr.mxu0 0.0
    %300 = vmatpush1.msra.mxu0 %v50
    %301 = vmatprep.subr.mxu0 0.0
    %302 = vmatpush1.msra.mxu0 %v51
    %303 = vmatprep.subr.mxu0 0.0
    %304 = vmatpush1.msra.mxu0 %v52
    %305 = vmatprep.subr.mxu0 0.0
    %306 = vmatpush1.msra.mxu0 %v53
    %307 = vmatprep.subr.mxu0 0.0
    %308 = vmatpush1.msra.mxu0 %v54
    %309 = vmatprep.subr.mxu0 0.0
    %310 = vmatpush1.msra.mxu0 %v55
    %311 = vmatprep.subr.mxu0 0.0
    %312 = vmatpush1.msra.mxu0 %v56
    %313 = vmatprep.subr.mxu0 0.0
    %314 = vmatpush1.msra.mxu0 %v57
    %315 = vmatprep.subr.mxu0 0.0
    %316 = vmatpush1.msra.mxu0 %v58
    %317 = vmatprep.subr.mxu0 0.0
    %318 = vmatpush1.msra.mxu0 %v59
    %319 = vmatprep.subr.mxu0 0.0
    %320 = vmatpush1.msra.mxu0 %v60
    %321 = vmatprep.subr.mxu0 0.0
    %322 = vmatpush1.msra.mxu0 0.0
    %323 = vmatprep.subr.mxu0 0.0
    %324 = vmatpush1.msra.mxu0 0.0
    %325 = vmatprep.subr.mxu0 0.0
    %326 = vmatpush1.msra.mxu0 0.0
    %327 = vmatprep.subr.mxu0 0.0
    %328 = vmatpush1.msra.mxu0 0.0
    %329 = vmatprep.subr.mxu0 0.0
    %330 = vmatpush1.msra.mxu0 0.0
    %331 = vmatprep.subr.mxu0 0.0
    %332 = vmatpush1.msra.mxu0 0.0
    %333 = vmatprep.subr.mxu0 0.0
    %334 = vmatpush1.msra.mxu0 0.0
    %335 = vmatprep.subr.mxu0 0.0
    %336 = vmatpush1.msra.mxu0 0.0
    %337 = vmatprep.subr.mxu0 0.0
    %338 = vmatpush1.msra.mxu0 0.0
    %339 = vmatprep.subr.mxu0 0.0
    %340 = vmatpush1.msra.mxu0 0.0
    %341 = vmatprep.subr.mxu0 0.0
    %342 = vmatpush1.msra.mxu0 0.0
    %343 = vmatprep.subr.mxu0 0.0
    %344 = vmatpush1.msra.mxu0 0.0
    %345 = vmatprep.subr.mxu0 0.0
    %346 = vmatpush1.msra.mxu0 0.0
    %347 = vmatprep.subr.mxu0 0.0
    %348 = vmatpush1.msra.mxu0 0.0
    %349 = vmatprep.subr.mxu0 0.0
    %350 = vmatpush1.msra.mxu0 0.0
    %351 = vmatprep.subr.mxu0 0.0
    %352 = vmatpush1.msra.mxu0 0.0
    %353 = vmatprep.mubr.f32.mxu0 0.0
    %354 = vmatmul.mubr.f32.gmra.mrb[0].mxu0 %v286
    %v355 = vpop.f32.mrb[0].mxu0
    %v356 = vadd.f32 %v141, %v355
    %v357 = vpop.f32.mrb[0].mxu0
    %358 = vdwg.mxu0
    %s359 = scalar_lea.vmem %s0, 4
    %v360 = vld [vmem:[%s359] sm:$0x3]
    %361 = vmatprep.subr.mxu0 0.0
    %362 = vmatpush1.msra.mxu0 %v29
    %363 = vmatprep.subr.mxu0 0.0
    %364 = vmatpush1.msra.mxu0 %v30
    %365 = vmatprep.subr.mxu0 0.0
    %366 = vmatpush1.msra.mxu0 %v31
    %367 = vmatprep.subr.mxu0 0.0
    %368 = vmatpush1.msra.mxu0 %v32
    %369 = vmatprep.subr.mxu0 0.0
    %370 = vmatpush1.msra.mxu0 %v33
    %371 = vmatprep.subr.mxu0 0.0
    %372 = vmatpush1.msra.mxu0 %v34
    %373 = vmatprep.subr.mxu0 0.0
    %374 = vmatpush1.msra.mxu0 %v35
    %375 = vmatprep.subr.mxu0 0.0
    %376 = vmatpush1.msra.mxu0 %v36
    %377 = vmatprep.subr.mxu0 0.0
    %378 = vmatpush1.msra.mxu0 %v37
    %379 = vmatprep.subr.mxu0 0.0
    %380 = vmatpush1.msra.mxu0 %v38
    %381 = vmatprep.subr.mxu0 0.0
    %382 = vmatpush1.msra.mxu0 %v39
    %383 = vmatprep.subr.mxu0 0.0
    %384 = vmatpush1.msra.mxu0 %v40
    %385 = vmatprep.subr.mxu0 0.0
    %386 = vmatpush1.msra.mxu0 %v41
    %387 = vmatprep.subr.mxu0 0.0
    %388 = vmatpush1.msra.mxu0 %v42
    %389 = vmatprep.subr.mxu0 0.0
    %390 = vmatpush1.msra.mxu0 %v43
    %391 = vmatprep.subr.mxu0 0.0
    %392 = vmatpush1.msra.mxu0 %v44
    %393 = vmatprep.subr.mxu0 0.0
    %394 = vmatpush1.msra.mxu0 0.0
    %395 = vmatprep.subr.mxu0 0.0
    %396 = vmatpush1.msra.mxu0 0.0
    %397 = vmatprep.subr.mxu0 0.0
    %398 = vmatpush1.msra.mxu0 0.0
    %399 = vmatprep.subr.mxu0 0.0
    %400 = vmatpush1.msra.mxu0 0.0
    %401 = vmatprep.subr.mxu0 0.0
    %402 = vmatpush1.msra.mxu0 0.0
    %403 = vmatprep.subr.mxu0 0.0
    %404 = vmatpush1.msra.mxu0 0.0
    %405 = vmatprep.subr.mxu0 0.0
    %406 = vmatpush1.msra.mxu0 0.0
    %407 = vmatprep.subr.mxu0 0.0
    %408 = vmatpush1.msra.mxu0 0.0
    %409 = vmatprep.subr.mxu0 0.0
    %410 = vmatpush1.msra.mxu0 0.0
    %411 = vmatprep.subr.mxu0 0.0
    %412 = vmatpush1.msra.mxu0 0.0
    %413 = vmatprep.subr.mxu0 0.0
    %414 = vmatpush1.msra.mxu0 0.0
    %415 = vmatprep.subr.mxu0 0.0
    %416 = vmatpush1.msra.mxu0 0.0
    %417 = vmatprep.subr.mxu0 0.0
    %418 = vmatpush1.msra.mxu0 0.0
    %419 = vmatprep.subr.mxu0 0.0
    %420 = vmatpush1.msra.mxu0 0.0
    %421 = vmatprep.subr.mxu0 0.0
    %422 = vmatpush1.msra.mxu0 0.0
    %423 = vmatprep.subr.mxu0 0.0
    %424 = vmatpush1.msra.mxu0 0.0
    %425 = vmatprep.mubr.f32.mxu0 0.0
    %426 = vmatmul.mubr.f32.gmra.mrb[0].mxu0 %v356
    %v427 = vpop.f32.mrb[0].mxu0
    %v428 = vadd.f32 0.0, %v427
    %v429 = vpop.f32.mrb[0].mxu0
    %430 = vdwg.mxu0
    %v431 = vadd.f32 %v360, %v428
    %v432 = vtanh.pop %v431
    %s433 = scalar_lea.vmem %s5, 4
    %434 = vst [vmem:[%s433] sm:$0x3] %v432
    %435 = vmatprep.subr.mxu0 0.0
    %436 = vmatpush1.msra.mxu0 %v45
    %437 = vmatprep.subr.mxu0 0.0
    %438 = vmatpush1.msra.mxu0 %v46
    %439 = vmatprep.subr.mxu0 0.0
    %440 = vmatpush1.msra.mxu0 %v47
    %441 = vmatprep.subr.mxu0 0.0
    %442 = vmatpush1.msra.mxu0 %v48
    %443 = vmatprep.subr.mxu0 0.0
    %444 = vmatpush1.msra.mxu0 %v49
    %445 = vmatprep.subr.mxu0 0.0
    %446 = vmatpush1.msra.mxu0 %v50
    %447 = vmatprep.subr.mxu0 0.0
    %448 = vmatpush1.msra.mxu0 %v51
    %449 = vmatprep.subr.mxu0 0.0
    %450 = vmatpush1.msra.mxu0 %v52
    %451 = vmatprep.subr.mxu0 0.0
    %452 = vmatpush1.msra.mxu0 %v53
    %453 = vmatprep.subr.mxu0 0.0
    %454 = vmatpush1.msra.mxu0 %v54
    %455 = vmatprep.subr.mxu0 0.0
    %456 = vmatpush1.msra.mxu0 %v55
    %457 = vmatprep.subr.mxu0 0.0
    %458 = vmatpush1.msra.mxu0 %v56
    %459 = vmatprep.subr.mxu0 0.0
    %460 = vmatpush1.msra.mxu0 %v57
    %461 = vmatprep.subr.mxu0 0.0
    %462 = vmatpush1.msra.mxu0 %v58
    %463 = vmatprep.subr.mxu0 0.0
    %464 = vmatpush1.msra.mxu0 %v59
    %465 = vmatprep.subr.mxu0 0.0
    %466 = vmatpush1.msra.mxu0 %v60
    %467 = vmatprep.subr.mxu0 0.0
    %468 = vmatpush1.msra.mxu0 0.0
    %469 = vmatprep.subr.mxu0 0.0
    %470 = vmatpush1.msra.mxu0 0.0
    %471 = vmatprep.subr.mxu0 0.0
    %472 = vmatpush1.msra.mxu0 0.0
    %473 = vmatprep.subr.mxu0 0.0
    %474 = vmatpush1.msra.mxu0 0.0
    %475 = vmatprep.subr.mxu0 0.0
    %476 = vmatpush1.msra.mxu0 0.0
    %477 = vmatprep.subr.mxu0 0.0
    %478 = vmatpush1.msra.mxu0 0.0
    %479 = vmatprep.subr.mxu0 0.0
    %480 = vmatpush1.msra.mxu0 0.0
    %481 = vmatprep.subr.mxu0 0.0
    %482 = vmatpush1.msra.mxu0 0.0
    %483 = vmatprep.subr.mxu0 0.0
    %484 = vmatpush1.msra.mxu0 0.0
    %485 = vmatprep.subr.mxu0 0.0
    %486 = vmatpush1.msra.mxu0 0.0
    %487 = vmatprep.subr.mxu0 0.0
    %488 = vmatpush1.msra.mxu0 0.0
    %489 = vmatprep.subr.mxu0 0.0
    %490 = vmatpush1.msra.mxu0 0.0
    %491 = vmatprep.subr.mxu0 0.0
    %492 = vmatpush1.msra.mxu0 0.0
    %493 = vmatprep.subr.mxu0 0.0
    %494 = vmatpush1.msra.mxu0 0.0
    %495 = vmatprep.subr.mxu0 0.0
    %496 = vmatpush1.msra.mxu0 0.0
    %497 = vmatprep.subr.mxu0 0.0
    %498 = vmatpush1.msra.mxu0 0.0
    %499 = vmatprep.mubr.f32.mxu0 0.0
    %500 = vmatmul.mubr.f32.gmra.mrb[0].mxu0 %v432
    %v501 = vpop.f32.mrb[0].mxu0
    %v502 = vadd.f32 %v141, %v501
    %v503 = vpop.f32.mrb[0].mxu0
    %504 = vdwg.mxu0
    %s505 = scalar_lea.vmem %s0, 6
    %v506 = vld [vmem:[%s505] sm:$0x3]
    %507 = vmatprep.subr.mxu0 0.0
    %508 = vmatpush1.msra.mxu0 %v29
    %509 = vmatprep.subr.mxu0 0.0
    %510 = vmatpush1.msra.mxu0 %v30
    %511 = vmatprep.subr.mxu0 0.0
    %512 = vmatpush1.msra.mxu0 %v31
    %513 = vmatprep.subr.mxu0 0.0
    %514 = vmatpush1.msra.mxu0 %v32
    %515 = vmatprep.subr.mxu0 0.0
    %516 = vmatpush1.msra.mxu0 %v33
    %517 = vmatprep.subr.mxu0 0.0
    %518 = vmatpush1.msra.mxu0 %v34
    %519 = vmatprep.subr.mxu0 0.0
    %520 = vmatpush1.msra.mxu0 %v35
    %521 = vmatprep.subr.mxu0 0.0
    %522 = vmatpush1.msra.mxu0 %v36
    %523 = vmatprep.subr.mxu0 0.0
    %524 = vmatpush1.msra.mxu0 %v37
    %525 = vmatprep.subr.mxu0 0.0
    %526 = vmatpush1.msra.mxu0 %v38
    %527 = vmatprep.subr.mxu0 0.0
    %528 = vmatpush1.msra.mxu0 %v39
    %529 = vmatprep.subr.mxu0 0.0
    %530 = vmatpush1.msra.mxu0 %v40
    %531 = vmatprep.subr.mxu0 0.0
    %532 = vmatpush1.msra.mxu0 %v41
    %533 = vmatprep.subr.mxu0 0.0
    %534 = vmatpush1.msra.mxu0 %v42
    %535 = vmatprep.subr.mxu0 0.0
    %536 = vmatpush1.msra.mxu0 %v43
    %537 = vmatprep.subr.mxu0 0.0
    %538 = vmatpush1.msra.mxu0 %v44
    %539 = vmatprep.subr.mxu0 0.0
    %540 = vmatpush1.msra.mxu0 0.0
    %541 = vmatprep.subr.mxu0 0.0
    %542 = vmatpush1.msra.mxu0 0.0
    %543 = vmatprep.subr.mxu0 0.0
    %544 = vmatpush1.msra.mxu0 0.0
    %545 = vmatprep.subr.mxu0 0.0
    %546 = vmatpush1.msra.mxu0 0.0
    %547 = vmatprep.subr.mxu0 0.0
    %548 = vmatpush1.msra.mxu0 0.0
    %549 = vmatprep.subr.mxu0 0.0
    %550 = vmatpush1.msra.mxu0 0.0
    %551 = vmatprep.subr.mxu0 0.0
    %552 = vmatpush1.msra.mxu0 0.0
    %553 = vmatprep.subr.mxu0 0.0
    %554 = vmatpush1.msra.mxu0 0.0
    %555 = vmatprep.subr.mxu0 0.0
    %556 = vmatpush1.msra.mxu0 0.0
    %557 = vmatprep.subr.mxu0 0.0
    %558 = vmatpush1.msra.mxu0 0.0
    %559 = vmatprep.subr.mxu0 0.0
    %560 = vmatpush1.msra.mxu0 0.0
    %561 = vmatprep.subr.mxu0 0.0
    %562 = vmatpush1.msra.mxu0 0.0
    %563 = vmatprep.subr.mxu0 0.0
    %564 = vmatpush1.msra.mxu0 0.0
    %565 = vmatprep.subr.mxu0 0.0
    %566 = vmatpush1.msra.mxu0 0.0
    %567 = vmatprep.subr.mxu0 0.0
    %568 = vmatpush1.msra.mxu0 0.0
    %569 = vmatprep.subr.mxu0 0.0
    %570 = vmatpush1.msra.mxu0 0.0
    %571 = vmatprep.mubr.f32.mxu0 0.0
    %572 = vmatmul.mubr.f32.gmra.mrb[0].mxu0 %v502
    %v573 = vpop.f32.mrb[0].mxu0
    %v574 = vadd.f32 0.0, %v573
    %v575 = vpop.f32.mrb[0].mxu0
    %576 = vdwg.mxu0
    %v577 = vadd.f32 %v506, %v574
    %v578 = vtanh.pop %v577
    %s579 = scalar_lea.vmem %s5, 6
    %580 = vst [vmem:[%s579] sm:$0x3] %v578
    %581 = vmatprep.subr.mxu0 0.0
    %582 = vmatpush1.msra.mxu0 %v45
    %583 = vmatprep.subr.mxu0 0.0
    %584 = vmatpush1.msra.mxu0 %v46
    %585 = vmatprep.subr.mxu0 0.0
    %586 = vmatpush1.msra.mxu0 %v47
    %587 = vmatprep.subr.mxu0 0.0
    %588 = vmatpush1.msra.mxu0 %v48
    %589 = vmatprep.subr.mxu0 0.0
    %590 = vmatpush1.msra.mxu0 %v49
    %591 = vmatprep.subr.mxu0 0.0
    %592 = vmatpush1.msra.mxu0 %v50
    %593 = vmatprep.subr.mxu0 0.0
    %594 = vmatpush1.msra.mxu0 %v51
    %595 = vmatprep.subr.mxu0 0.0
    %596 = vmatpush1.msra.mxu0 %v52
    %597 = vmatprep.subr.mxu0 0.0
    %598 = vmatpush1.msra.mxu0 %v53
    %599 = vmatprep.subr.mxu0 0.0
    %600 = vmatpush1.msra.mxu0 %v54
    %601 = vmatprep.subr.mxu0 0.0
    %602 = vmatpush1.msra.mxu0 %v55
    %603 = vmatprep.subr.mxu0 0.0
    %604 = vmatpush1.msra.mxu0 %v56
    %605 = vmatprep.subr.mxu0 0.0
    %606 = vmatpush1.msra.mxu0 %v57
    %607 = vmatprep.subr.mxu0 0.0
    %608 = vmatpush1.msra.mxu0 %v58
    %609 = vmatprep.subr.mxu0 0.0
    %610 = vmatpush1.msra.mxu0 %v59
    %611 = vmatprep.subr.mxu0 0.0
    %612 = vmatpush1.msra.mxu0 %v60
    %613 = vmatprep.subr.mxu0 0.0
    %614 = vmatpush1.msra.mxu0 0.0
    %615 = vmatprep.subr.mxu0 0.0
    %616 = vmatpush1.msra.mxu0 0.0
    %617 = vmatprep.subr.mxu0 0.0
    %618 = vmatpush1.msra.mxu0 0.0
    %619 = vmatprep.subr.mxu0 0.0
    %620 = vmatpush1.msra.mxu0 0.0
    %621 = vmatprep.subr.mxu0 0.0
    %622 = vmatpush1.msra.mxu0 0.0
    %623 = vmatprep.subr.mxu0 0.0
    %624 = vmatpush1.msra.mxu0 0.0
    %625 = vmatprep.subr.mxu0 0.0
    %626 = vmatpush1.msra.mxu0 0.0
    %627 = vmatprep.subr.mxu0 0.0
    %628 = vmatpush1.msra.mxu0 0.0
    %629 = vmatprep.subr.mxu0 0.0
    %630 = vmatpush1.msra.mxu0 0.0
    %631 = vmatprep.subr.mxu0 0.0
    %632 = vmatpush1.msra.mxu0 0.0
    %633 = vmatprep.subr.mxu0 0.0
    %634 = vmatpush1.msra.mxu0 0.0
    %635 = vmatprep.subr.mxu0 0.0
    %636 = vmatpush1.msra.mxu0 0.0
    %637 = vmatprep.subr.mxu0 0.0
    %638 = vmatpush1.msra.mxu0 0.0
    %639 = vmatprep.subr.mxu0 0.0
    %640 = vmatpush1.msra.mxu0 0.0
    %641 = vmatprep.subr.mxu0 0.0
    %642 = vmatpush1.msra.mxu0 0.0
    %643 = vmatprep.subr.mxu0 0.0
    %644 = vmatpush1.msra.mxu0 0.0
    %645 = vmatprep.mubr.f32.mxu0 0.0
    %646 = vmatmul.mubr.f32.gmra.mrb[0].mxu0 %v578
    %v647 = vpop.f32.mrb[0].mxu0
    %v648 = vadd.f32 %v141, %v647
    %v649 = vpop.f32.mrb[0].mxu0
    %650 = vdwg.mxu0
    %s651 = scalar_lea.vmem %s0, 8
    %v652 = vld [vmem:[%s651] sm:$0x3]
    %653 = vmatprep.subr.mxu0 0.0
    %654 = vmatpush1.msra.mxu0 %v29
    %655 = vmatprep.subr.mxu0 0.0
    %656 = vmatpush1.msra.mxu0 %v30
    %657 = vmatprep.subr.mxu0 0.0
    %658 = vmatpush1.msra.mxu0 %v31
    %659 = vmatprep.subr.mxu0 0.0
    %660 = vmatpush1.msra.mxu0 %v32
    %661 = vmatprep.subr.mxu0 0.0
    %662 = vmatpush1.msra.mxu0 %v33
    %663 = vmatprep.subr.mxu0 0.0
    %664 = vmatpush1.msra.mxu0 %v34
    %665 = vmatprep.subr.mxu0 0.0
    %666 = vmatpush1.msra.mxu0 %v35
    %667 = vmatprep.subr.mxu0 0.0
    %668 = vmatpush1.msra.mxu0 %v36
    %669 = vmatprep.subr.mxu0 0.0
    %670 = vmatpush1.msra.mxu0 %v37
    %671 = vmatprep.subr.mxu0 0.0
    %672 = vmatpush1.msra.mxu0 %v38
    %673 = vmatprep.subr.mxu0 0.0
    %674 = vmatpush1.msra.mxu0 %v39
    %675 = vmatprep.subr.mxu0 0.0
    %676 = vmatpush1.msra.mxu0 %v40
    %677 = vmatprep.subr.mxu0 0.0
    %678 = vmatpush1.msra.mxu0 %v41
    %679 = vmatprep.subr.mxu0 0.0
    %680 = vmatpush1.msra.mxu0 %v42
    %681 = vmatprep.subr.mxu0 0.0
    %682 = vmatpush1.msra.mxu0 %v43
    %683 = vmatprep.subr.mxu0 0.0
    %684 = vmatpush1.msra.mxu0 %v44
    %685 = vmatprep.subr.mxu0 0.0
    %686 = vmatpush1.msra.mxu0 0.0
    %687 = vmatprep.subr.mxu0 0.0
    %688 = vmatpush1.msra.mxu0 0.0
    %689 = vmatprep.subr.mxu0 0.0
    %690 = vmatpush1.msra.mxu0 0.0
    %691 = vmatprep.subr.mxu0 0.0
    %692 = vmatpush1.msra.mxu0 0.0
    %693 = vmatprep.subr.mxu0 0.0
    %694 = vmatpush1.msra.mxu0 0.0
    %695 = vmatprep.subr.mxu0 0.0
    %696 = vmatpush1.msra.mxu0 0.0
    %697 = vmatprep.subr.mxu0 0.0
    %698 = vmatpush1.msra.mxu0 0.0
    %699 = vmatprep.subr.mxu0 0.0
    %700 = vmatpush1.msra.mxu0 0.0
    %701 = vmatprep.subr.mxu0 0.0
    %702 = vmatpush1.msra.mxu0 0.0
    %703 = vmatprep.subr.mxu0 0.0
    %704 = vmatpush1.msra.mxu0 0.0
    %705 = vmatprep.subr.mxu0 0.0
    %706 = vmatpush1.msra.mxu0 0.0
    %707 = vmatprep.subr.mxu0 0.0
    %708 = vmatpush1.msra.mxu0 0.0
    %709 = vmatprep.subr.mxu0 0.0
    %710 = vmatpush1.msra.mxu0 0.0
    %711 = vmatprep.subr.mxu0 0.0
    %712 = vmatpush1.msra.mxu0 0.0
    %713 = vmatprep.subr.mxu0 0.0
    %714 = vmatpush1.msra.mxu0 0.0
    %715 = vmatprep.subr.mxu0 0.0
    %716 = vmatpush1.msra.mxu0 0.0
    %717 = vmatprep.mubr.f32.mxu0 0.0
    %718 = vmatmul.mubr.f32.gmra.mrb[0].mxu0 %v648
    %v719 = vpop.f32.mrb[0].mxu0
    %v720 = vadd.f32 0.0, %v719
    %v721 = vpop.f32.mrb[0].mxu0
    %722 = vdwg.mxu0
    %v723 = vadd.f32 %v652, %v720
    %v724 = vtanh.pop %v723
    %s725 = scalar_lea.vmem %s5, 8
    %726 = vst [vmem:[%s725] sm:$0x3] %v724
    %727 = vmatprep.subr.mxu0 0.0
    %728 = vmatpush1.msra.mxu0 %v45
    %729 = vmatprep.subr.mxu0 0.0
    %730 = vmatpush1.msra.mxu0 %v46
    %731 = vmatprep.subr.mxu0 0.0
    %732 = vmatpush1.msra.mxu0 %v47
    %733 = vmatprep.subr.mxu0 0.0
    %734 = vmatpush1.msra.mxu0 %v48
    %735 = vmatprep.subr.mxu0 0.0
    %736 = vmatpush1.msra.mxu0 %v49
    %737 = vmatprep.subr.mxu0 0.0
    %738 = vmatpush1.msra.mxu0 %v50
    %739 = vmatprep.subr.mxu0 0.0
    %740 = vmatpush1.msra.mxu0 %v51
    %741 = vmatprep.subr.mxu0 0.0
    %742 = vmatpush1.msra.mxu0 %v52
    %743 = vmatprep.subr.mxu0 0.0
    %744 = vmatpush1.msra.mxu0 %v53
    %745 = vmatprep.subr.mxu0 0.0
    %746 = vmatpush1.msra.mxu0 %v54
    %747 = vmatprep.subr.mxu0 0.0
    %748 = vmatpush1.msra.mxu0 %v55
    %749 = vmatprep.subr.mxu0 0.0
    %750 = vmatpush1.msra.mxu0 %v56
    %751 = vmatprep.subr.mxu0 0.0
    %752 = vmatpush1.msra.mxu0 %v57
    %753 = vmatprep.subr.mxu0 0.0
    %754 = vmatpush1.msra.mxu0 %v58
    %755 = vmatprep.subr.mxu0 0.0
    %756 = vmatpush1.msra.mxu0 %v59
    %757 = vmatprep.subr.mxu0 0.0
    %758 = vmatpush1.msra.mxu0 %v60
    %759 = vmatprep.subr.mxu0 0.0
    %760 = vmatpush1.msra.mxu0 0.0
    %761 = vmatprep.subr.mxu0 0.0
    %762 = vmatpush1.msra.mxu0 0.0
    %763 = vmatprep.subr.mxu0 0.0
    %764 = vmatpush1.msra.mxu0 0.0
    %765 = vmatprep.subr.mxu0 0.0
    %766 = vmatpush1.msra.mxu0 0.0
    %767 = vmatprep.subr.mxu0 0.0
    %768 = vmatpush1.msra.mxu0 0.0
    %769 = vmatprep.subr.mxu0 0.0
    %770 = vmatpush1.msra.mxu0 0.0
    %771 = vmatprep.subr.mxu0 0.0
    %772 = vmatpush1.msra.mxu0 0.0
    %773 = vmatprep.subr.mxu0 0.0
    %774 = vmatpush1.msra.mxu0 0.0
    %775 = vmatprep.subr.mxu0 0.0
    %776 = vmatpush1.msra.mxu0 0.0
    %777 = vmatprep.subr.mxu0 0.0
    %778 = vmatpush1.msra.mxu0 0.0
    %779 = vmatprep.subr.mxu0 0.0
    %780 = vmatpush1.msra.mxu0 0.0
    %781 = vmatprep.subr.mxu0 0.0
    %782 = vmatpush1.msra.mxu0 0.0
    %783 = vmatprep.subr.mxu0 0.0
    %784 = vmatpush1.msra.mxu0 0.0
    %785 = vmatprep.subr.mxu0 0.0
    %786 = vmatpush1.msra.mxu0 0.0
    %787 = vmatprep.subr.mxu0 0.0
    %788 = vmatpush1.msra.mxu0 0.0
    %789 = vmatprep.subr.mxu0 0.0
    %790 = vmatpush1.msra.mxu0 0.0
    %791 = vmatprep.mubr.f32.mxu0 0.0
    %792 = vmatmul.mubr.f32.gmra.mrb[0].mxu0 %v724
    %v793 = vpop.f32.mrb[0].mxu0
    %v794 = vadd.f32 %v141, %v793
    %v795 = vpop.f32.mrb[0].mxu0
    %796 = vdwg.mxu0
    %s797 = scalar_lea.vmem %s0, 10
    %v798 = vld [vmem:[%s797] sm:$0x3]
    %799 = vmatprep.subr.mxu0 0.0
    %800 = vmatpush1.msra.mxu0 %v29
    %801 = vmatprep.subr.mxu0 0.0
    %802 = vmatpush1.msra.mxu0 %v30
    %803 = vmatprep.subr.mxu0 0.0
    %804 = vmatpush1.msra.mxu0 %v31
    %805 = vmatprep.subr.mxu0 0.0
    %806 = vmatpush1.msra.mxu0 %v32
    %807 = vmatprep.subr.mxu0 0.0
    %808 = vmatpush1.msra.mxu0 %v33
    %809 = vmatprep.subr.mxu0 0.0
    %810 = vmatpush1.msra.mxu0 %v34
    %811 = vmatprep.subr.mxu0 0.0
    %812 = vmatpush1.msra.mxu0 %v35
    %813 = vmatprep.subr.mxu0 0.0
    %814 = vmatpush1.msra.mxu0 %v36
    %815 = vmatprep.subr.mxu0 0.0
    %816 = vmatpush1.msra.mxu0 %v37
    %817 = vmatprep.subr.mxu0 0.0
    %818 = vmatpush1.msra.mxu0 %v38
    %819 = vmatprep.subr.mxu0 0.0
    %820 = vmatpush1.msra.mxu0 %v39
    %821 = vmatprep.subr.mxu0 0.0
    %822 = vmatpush1.msra.mxu0 %v40
    %823 = vmatprep.subr.mxu0 0.0
    %824 = vmatpush1.msra.mxu0 %v41
    %825 = vmatprep.subr.mxu0 0.0
    %826 = vmatpush1.msra.mxu0 %v42
    %827 = vmatprep.subr.mxu0 0.0
    %828 = vmatpush1.msra.mxu0 %v43
    %829 = vmatprep.subr.mxu0 0.0
    %830 = vmatpush1.msra.mxu0 %v44
    %831 = vmatprep.subr.mxu0 0.0
    %832 = vmatpush1.msra.mxu0 0.0
    %833 = vmatprep.subr.mxu0 0.0
    %834 = vmatpush1.msra.mxu0 0.0
    %835 = vmatprep.subr.mxu0 0.0
    %836 = vmatpush1.msra.mxu0 0.0
    %837 = vmatprep.subr.mxu0 0.0
    %838 = vmatpush1.msra.mxu0 0.0
    %839 = vmatprep.subr.mxu0 0.0
    %840 = vmatpush1.msra.mxu0 0.0
    %841 = vmatprep.subr.mxu0 0.0
    %842 = vmatpush1.msra.mxu0 0.0
    %843 = vmatprep.subr.mxu0 0.0
    %844 = vmatpush1.msra.mxu0 0.0
    %845 = vmatprep.subr.mxu0 0.0
    %846 = vmatpush1.msra.mxu0 0.0
    %847 = vmatprep.subr.mxu0 0.0
    %848 = vmatpush1.msra.mxu0 0.0
    %849 = vmatprep.subr.mxu0 0.0
    %850 = vmatpush1.msra.mxu0 0.0
    %851 = vmatprep.subr.mxu0 0.0
    %852 = vmatpush1.msra.mxu0 0.0
    %853 = vmatprep.subr.mxu0 0.0
    %854 = vmatpush1.msra.mxu0 0.0
    %855 = vmatprep.subr.mxu0 0.0
    %856 = vmatpush1.msra.mxu0 0.0
    %857 = vmatprep.subr.mxu0 0.0
    %858 = vmatpush1.msra.mxu0 0.0
    %859 = vmatprep.subr.mxu0 0.0
    %860 = vmatpush1.msra.mxu0 0.0
    %861 = vmatprep.subr.mxu0 0.0
    %862 = vmatpush1.msra.mxu0 0.0
    %863 = vmatprep.mubr.f32.mxu0 0.0
    %864 = vmatmul.mubr.f32.gmra.mrb[0].mxu0 %v794
    %v865 = vpop.f32.mrb[0].mxu0
    %v866 = vadd.f32 0.0, %v865
    %v867 = vpop.f32.mrb[0].mxu0
    %868 = vdwg.mxu0
    %v869 = vadd.f32 %v798, %v866
    %v870 = vtanh.pop %v869
    %s871 = scalar_lea.vmem %s5, 10
    %872 = vst [vmem:[%s871] sm:$0x3] %v870
    %873 = vmatprep.subr.mxu0 0.0
    %874 = vmatpush1.msra.mxu0 %v45
    %875 = vmatprep.subr.mxu0 0.0
    %876 = vmatpush1.msra.mxu0 %v46
    %877 = vmatprep.subr.mxu0 0.0
    %878 = vmatpush1.msra.mxu0 %v47
    %879 = vmatprep.subr.mxu0 0.0
    %880 = vmatpush1.msra.mxu0 %v48
    %881 = vmatprep.subr.mxu0 0.0
    %882 = vmatpush1.msra.mxu0 %v49
    %883 = vmatprep.subr.mxu0 0.0
    %884 = vmatpush1.msra.mxu0 %v50
    %885 = vmatprep.subr.mxu0 0.0
    %886 = vmatpush1.msra.mxu0 %v51
    %887 = vmatprep.subr.mxu0 0.0
    %888 = vmatpush1.msra.mxu0 %v52
    %889 = vmatprep.subr.mxu0 0.0
    %890 = vmatpush1.msra.mxu0 %v53
    %891 = vmatprep.subr.mxu0 0.0
    %892 = vmatpush1.msra.mxu0 %v54
    %893 = vmatprep.subr.mxu0 0.0
    %894 = vmatpush1.msra.mxu0 %v55
    %895 = vmatprep.subr.mxu0 0.0
    %896 = vmatpush1.msra.mxu0 %v56
    %897 = vmatprep.subr.mxu0 0.0
    %898 = vmatpush1.msra.mxu0 %v57
    %899 = vmatprep.subr.mxu0 0.0
    %900 = vmatpush1.msra.mxu0 %v58
    %901 = vmatprep.subr.mxu0 0.0
    %902 = vmatpush1.msra.mxu0 %v59
    %903 = vmatprep.subr.mxu0 0.0
    %904 = vmatpush1.msra.mxu0 %v60
    %905 = vmatprep.subr.mxu0 0.0
    %906 = vmatpush1.msra.mxu0 0.0
    %907 = vmatprep.subr.mxu0 0.0
    %908 = vmatpush1.msra.mxu0 0.0
    %909 = vmatprep.subr.mxu0 0.0
    %910 = vmatpush1.msra.mxu0 0.0
    %911 = vmatprep.subr.mxu0 0.0
    %912 = vmatpush1.msra.mxu0 0.0
    %913 = vmatprep.subr.mxu0 0.0
    %914 = vmatpush1.msra.mxu0 0.0
    %915 = vmatprep.subr.mxu0 0.0
    %916 = vmatpush1.msra.mxu0 0.0
    %917 = vmatprep.subr.mxu0 0.0
    %918 = vmatpush1.msra.mxu0 0.0
    %919 = vmatprep.subr.mxu0 0.0
    %920 = vmatpush1.msra.mxu0 0.0
    %921 = vmatprep.subr.mxu0 0.0
    %922 = vmatpush1.msra.mxu0 0.0
    %923 = vmatprep.subr.mxu0 0.0
    %924 = vmatpush1.msra.mxu0 0.0
    %925 = vmatprep.subr.mxu0 0.0
    %926 = vmatpush1.msra.mxu0 0.0
    %927 = vmatprep.subr.mxu0 0.0
    %928 = vmatpush1.msra.mxu0 0.0
    %929 = vmatprep.subr.mxu0 0.0
    %930 = vmatpush1.msra.mxu0 0.0
    %931 = vmatprep.subr.mxu0 0.0
    %932 = vmatpush1.msra.mxu0 0.0
    %933 = vmatprep.subr.mxu0 0.0
    %934 = vmatpush1.msra.mxu0 0.0
    %935 = vmatprep.subr.mxu0 0.0
    %936 = vmatpush1.msra.mxu0 0.0
    %937 = vmatprep.mubr.f32.mxu0 0.0
    %938 = vmatmul.mubr.f32.gmra.mrb[0].mxu0 %v870
    %v939 = vpop.f32.mrb[0].mxu0
    %v940 = vadd.f32 %v141, %v939
    %v941 = vpop.f32.mrb[0].mxu0
    %942 = vdwg.mxu0
    %s943 = scalar_lea.vmem %s0, 12
    %v944 = vld [vmem:[%s943] sm:$0x3]
    %945 = vmatprep.subr.mxu0 0.0
    %946 = vmatpush1.msra.mxu0 %v29
    %947 = vmatprep.subr.mxu0 0.0
    %948 = vmatpush1.msra.mxu0 %v30
    %949 = vmatprep.subr.mxu0 0.0
    %950 = vmatpush1.msra.mxu0 %v31
    %951 = vmatprep.subr.mxu0 0.0
    %952 = vmatpush1.msra.mxu0 %v32
    %953 = vmatprep.subr.mxu0 0.0
    %954 = vmatpush1.msra.mxu0 %v33
    %955 = vmatprep.subr.mxu0 0.0
    %956 = vmatpush1.msra.mxu0 %v34
    %957 = vmatprep.subr.mxu0 0.0
    %958 = vmatpush1.msra.mxu0 %v35
    %959 = vmatprep.subr.mxu0 0.0
    %960 = vmatpush1.msra.mxu0 %v36
    %961 = vmatprep.subr.mxu0 0.0
    %962 = vmatpush1.msra.mxu0 %v37
    %963 = vmatprep.subr.mxu0 0.0
    %964 = vmatpush1.msra.mxu0 %v38
    %965 = vmatprep.subr.mxu0 0.0
    %966 = vmatpush1.msra.mxu0 %v39
    %967 = vmatprep.subr.mxu0 0.0
    %968 = vmatpush1.msra.mxu0 %v40
    %969 = vmatprep.subr.mxu0 0.0
    %970 = vmatpush1.msra.mxu0 %v41
    %971 = vmatprep.subr.mxu0 0.0
    %972 = vmatpush1.msra.mxu0 %v42
    %973 = vmatprep.subr.mxu0 0.0
    %974 = vmatpush1.msra.mxu0 %v43
    %975 = vmatprep.subr.mxu0 0.0
    %976 = vmatpush1.msra.mxu0 %v44
    %977 = vmatprep.subr.mxu0 0.0
    %978 = vmatpush1.msra.mxu0 0.0
    %979 = vmatprep.subr.mxu0 0.0
    %980 = vmatpush1.msra.mxu0 0.0
    %981 = vmatprep.subr.mxu0 0.0
    %982 = vmatpush1.msra.mxu0 0.0
    %983 = vmatprep.subr.mxu0 0.0
    %984 = vmatpush1.msra.mxu0 0.0
    %985 = vmatprep.subr.mxu0 0.0
    %986 = vmatpush1.msra.mxu0 0.0
    %987 = vmatprep.subr.mxu0 0.0
    %988 = vmatpush1.msra.mxu0 0.0
    %989 = vmatprep.subr.mxu0 0.0
    %990 = vmatpush1.msra.mxu0 0.0
    %991 = vmatprep.subr.mxu0 0.0
    %992 = vmatpush1.msra.mxu0 0.0
    %993 = vmatprep.subr.mxu0 0.0
    %994 = vmatpush1.msra.mxu0 0.0
    %995 = vmatprep.subr.mxu0 0.0
    %996 = vmatpush1.msra.mxu0 0.0
    %997 = vmatprep.subr.mxu0 0.0
    %998 = vmatpush1.msra.mxu0 0.0
    %999 = vmatprep.subr.mxu0 0.0
    %1000 = vmatpush1.msra.mxu0 0.0
    %1001 = vmatprep.subr.mxu0 0.0
    %1002 = vmatpush1.msra.mxu0 0.0
    %1003 = vmatprep.subr.mxu0 0.0
    %1004 = vmatpush1.msra.mxu0 0.0
    %1005 = vmatprep.subr.mxu0 0.0
    %1006 = vmatpush1.msra.mxu0 0.0
    %1007 = vmatprep.subr.mxu0 0.0
    %1008 = vmatpush1.msra.mxu0 0.0
    %1009 = vmatprep.mubr.f32.mxu0 0.0
    %1010 = vmatmul.mubr.f32.gmra.mrb[0].mxu0 %v940
    %v1011 = vpop.f32.mrb[0].mxu0
    %v1012 = vadd.f32 0.0, %v1011
    %v1013 = vpop.f32.mrb[0].mxu0
    %1014 = vdwg.mxu0
    %v1015 = vadd.f32 %v944, %v1012
    %v1016 = vtanh.pop %v1015
    %s1017 = scalar_lea.vmem %s5, 12
    %1018 = vst [vmem:[%s1017] sm:$0x3] %v1016
    %1019 = vmatprep.subr.mxu0 0.0
    %1020 = vmatpush1.msra.mxu0 %v45
    %1021 = vmatprep.subr.mxu0 0.0
    %1022 = vmatpush1.msra.mxu0 %v46
    %1023 = vmatprep.subr.mxu0 0.0
    %1024 = vmatpush1.msra.mxu0 %v47
    %1025 = vmatprep.subr.mxu0 0.0
    %1026 = vmatpush1.msra.mxu0 %v48
    %1027 = vmatprep.subr.mxu0 0.0
    %1028 = vmatpush1.msra.mxu0 %v49
    %1029 = vmatprep.subr.mxu0 0.0
    %1030 = vmatpush1.msra.mxu0 %v50
    %1031 = vmatprep.subr.mxu0 0.0
    %1032 = vmatpush1.msra.mxu0 %v51
    %1033 = vmatprep.subr.mxu0 0.0
    %1034 = vmatpush1.msra.mxu0 %v52
    %1035 = vmatprep.subr.mxu0 0.0
    %1036 = vmatpush1.msra.mxu0 %v53
    %1037 = vmatprep.subr.mxu0 0.0
    %1038 = vmatpush1.msra.mxu0 %v54
    %1039 = vmatprep.subr.mxu0 0.0
    %1040 = vmatpush1.msra.mxu0 %v55
    %1041 = vmatprep.subr.mxu0 0.0
    %1042 = vmatpush1.msra.mxu0 %v56
    %1043 = vmatprep.subr.mxu0 0.0
    %1044 = vmatpush1.msra.mxu0 %v57
    %1045 = vmatprep.subr.mxu0 0.0
    %1046 = vmatpush1.msra.mxu0 %v58
    %1047 = vmatprep.subr.mxu0 0.0
    %1048 = vmatpush1.msra.mxu0 %v59
    %1049 = vmatprep.subr.mxu0 0.0
    %1050 = vmatpush1.msra.mxu0 %v60
    %1051 = vmatprep.subr.mxu0 0.0
    %1052 = vmatpush1.msra.mxu0 0.0
    %1053 = vmatprep.subr.mxu0 0.0
    %1054 = vmatpush1.msra.mxu0 0.0
    %1055 = vmatprep.subr.mxu0 0.0
    %1056 = vmatpush1.msra.mxu0 0.0
    %1057 = vmatprep.subr.mxu0 0.0
    %1058 = vmatpush1.msra.mxu0 0.0
    %1059 = vmatprep.subr.mxu0 0.0
    %1060 = vmatpush1.msra.mxu0 0.0
    %1061 = vmatprep.subr.mxu0 0.0
    %1062 = vmatpush1.msra.mxu0 0.0
    %1063 = vmatprep.subr.mxu0 0.0
    %1064 = vmatpush1.msra.mxu0 0.0
    %1065 = vmatprep.subr.mxu0 0.0
    %1066 = vmatpush1.msra.mxu0 0.0
    %1067 = vmatprep.subr.mxu0 0.0
    %1068 = vmatpush1.msra.mxu0 0.0
    %1069 = vmatprep.subr.mxu0 0.0
    %1070 = vmatpush1.msra.mxu0 0.0
    %1071 = vmatprep.subr.mxu0 0.0
    %1072 = vmatpush1.msra.mxu0 0.0
    %1073 = vmatprep.subr.mxu0 0.0
    %1074 = vmatpush1.msra.mxu0 0.0
    %1075 = vmatprep.subr.mxu0 0.0
    %1076 = vmatpush1.msra.mxu0 0.0
    %1077 = vmatprep.subr.mxu0 0.0
    %1078 = vmatpush1.msra.mxu0 0.0
    %1079 = vmatprep.subr.mxu0 0.0
    %1080 = vmatpush1.msra.mxu0 0.0
    %1081 = vmatprep.subr.mxu0 0.0
    %1082 = vmatpush1.msra.mxu0 0.0
    %1083 = vmatprep.mubr.f32.mxu0 0.0
    %1084 = vmatmul.mubr.f32.gmra.mrb[0].mxu0 %v1016
    %v1085 = vpop.f32.mrb[0].mxu0
    %v1086 = vadd.f32 %v141, %v1085
    %v1087 = vpop.f32.mrb[0].mxu0
    %1088 = vdwg.mxu0
    %s1089 = scalar_lea.vmem %s0, 14
    %v1090 = vld [vmem:[%s1089] sm:$0x3]
    %1091 = vmatprep.subr.mxu0 0.0
    %1092 = vmatpush1.msra.mxu0 %v29
    %1093 = vmatprep.subr.mxu0 0.0
    %1094 = vmatpush1.msra.mxu0 %v30
    %1095 = vmatprep.subr.mxu0 0.0
    %1096 = vmatpush1.msra.mxu0 %v31
    %1097 = vmatprep.subr.mxu0 0.0
    %1098 = vmatpush1.msra.mxu0 %v32
    %1099 = vmatprep.subr.mxu0 0.0
    %1100 = vmatpush1.msra.mxu0 %v33
    %1101 = vmatprep.subr.mxu0 0.0
    %1102 = vmatpush1.msra.mxu0 %v34
    %1103 = vmatprep.subr.mxu0 0.0
    %1104 = vmatpush1.msra.mxu0 %v35
    %1105 = vmatprep.subr.mxu0 0.0
    %1106 = vmatpush1.msra.mxu0 %v36
    %1107 = vmatprep.subr.mxu0 0.0
    %1108 = vmatpush1.msra.mxu0 %v37
    %1109 = vmatprep.subr.mxu0 0.0
    %1110 = vmatpush1.msra.mxu0 %v38
    %1111 = vmatprep.subr.mxu0 0.0
    %1112 = vmatpush1.msra.mxu0 %v39
    %1113 = vmatprep.subr.mxu0 0.0
    %1114 = vmatpush1.msra.mxu0 %v40
    %1115 = vmatprep.subr.mxu0 0.0
    %1116 = vmatpush1.msra.mxu0 %v41
    %1117 = vmatprep.subr.mxu0 0.0
    %1118 = vmatpush1.msra.mxu0 %v42
    %1119 = vmatprep.subr.mxu0 0.0
    %1120 = vmatpush1.msra.mxu0 %v43
    %1121 = vmatprep.subr.mxu0 0.0
    %1122 = vmatpush1.msra.mxu0 %v44
    %1123 = vmatprep.subr.mxu0 0.0
    %1124 = vmatpush1.msra.mxu0 0.0
    %1125 = vmatprep.subr.mxu0 0.0
    %1126 = vmatpush1.msra.mxu0 0.0
    %1127 = vmatprep.subr.mxu0 0.0
    %1128 = vmatpush1.msra.mxu0 0.0
    %1129 = vmatprep.subr.mxu0 0.0
    %1130 = vmatpush1.msra.mxu0 0.0
    %1131 = vmatprep.subr.mxu0 0.0
    %1132 = vmatpush1.msra.mxu0 0.0
    %1133 = vmatprep.subr.mxu0 0.0
    %1134 = vmatpush1.msra.mxu0 0.0
    %1135 = vmatprep.subr.mxu0 0.0
    %1136 = vmatpush1.msra.mxu0 0.0
    %1137 = vmatprep.subr.mxu0 0.0
    %1138 = vmatpush1.msra.mxu0 0.0
    %1139 = vmatprep.subr.mxu0 0.0
    %1140 = vmatpush1.msra.mxu0 0.0
    %1141 = vmatprep.subr.mxu0 0.0
    %1142 = vmatpush1.msra.mxu0 0.0
    %1143 = vmatprep.subr.mxu0 0.0
    %1144 = vmatpush1.msra.mxu0 0.0
    %1145 = vmatprep.subr.mxu0 0.0
    %1146 = vmatpush1.msra.mxu0 0.0
    %1147 = vmatprep.subr.mxu0 0.0
    %1148 = vmatpush1.msra.mxu0 0.0
    %1149 = vmatprep.subr.mxu0 0.0
    %1150 = vmatpush1.msra.mxu0 0.0
    %1151 = vmatprep.subr.mxu0 0.0
    %1152 = vmatpush1.msra.mxu0 0.0
    %1153 = vmatprep.subr.mxu0 0.0
    %1154 = vmatpush1.msra.mxu0 0.0
    %1155 = vmatprep.mubr.f32.mxu0 0.0
    %1156 = vmatmul.mubr.f32.gmra.mrb[0].mxu0 %v1086
    %v1157 = vpop.f32.mrb[0].mxu0
    %v1158 = vadd.f32 0.0, %v1157
    %v1159 = vpop.f32.mrb[0].mxu0
    %1160 = vdwg.mxu0
    %v1161 = vadd.f32 %v1090, %v1158
    %v1162 = vtanh.pop %v1161
    %s1163 = scalar_lea.vmem %s5, 14
    %1164 = vst [vmem:[%s1163] sm:$0x3] %v1162
    %1165 = vmatprep.subr.mxu0 0.0
    %1166 = vmatpush1.msra.mxu0 %v45
    %1167 = vmatprep.subr.mxu0 0.0
    %1168 = vmatpush1.msra.mxu0 %v46
    %1169 = vmatprep.subr.mxu0 0.0
    %1170 = vmatpush1.msra.mxu0 %v47
    %1171 = vmatprep.subr.mxu0 0.0
    %1172 = vmatpush1.msra.mxu0 %v48
    %1173 = vmatprep.subr.mxu0 0.0
    %1174 = vmatpush1.msra.mxu0 %v49
    %1175 = vmatprep.subr.mxu0 0.0
    %1176 = vmatpush1.msra.mxu0 %v50
    %1177 = vmatprep.subr.mxu0 0.0
    %1178 = vmatpush1.msra.mxu0 %v51
    %1179 = vmatprep.subr.mxu0 0.0
    %1180 = vmatpush1.msra.mxu0 %v52
    %1181 = vmatprep.subr.mxu0 0.0
    %1182 = vmatpush1.msra.mxu0 %v53
    %1183 = vmatprep.subr.mxu0 0.0
    %1184 = vmatpush1.msra.mxu0 %v54
    %1185 = vmatprep.subr.mxu0 0.0
    %1186 = vmatpush1.msra.mxu0 %v55
    %1187 = vmatprep.subr.mxu0 0.0
    %1188 = vmatpush1.msra.mxu0 %v56
    %1189 = vmatprep.subr.mxu0 0.0
    %1190 = vmatpush1.msra.mxu0 %v57
    %1191 = vmatprep.subr.mxu0 0.0
    %1192 = vmatpush1.msra.mxu0 %v58
    %1193 = vmatprep.subr.mxu0 0.0
    %1194 = vmatpush1.msra.mxu0 %v59
    %1195 = vmatprep.subr.mxu0 0.0
    %1196 = vmatpush1.msra.mxu0 %v60
    %1197 = vmatprep.subr.mxu0 0.0
    %1198 = vmatpush1.msra.mxu0 0.0
    %1199 = vmatprep.subr.mxu0 0.0
    %1200 = vmatpush1.msra.mxu0 0.0
    %1201 = vmatprep.subr.mxu0 0.0
    %1202 = vmatpush1.msra.mxu0 0.0
    %1203 = vmatprep.subr.mxu0 0.0
    %1204 = vmatpush1.msra.mxu0 0.0
    %1205 = vmatprep.subr.mxu0 0.0
    %1206 = vmatpush1.msra.mxu0 0.0
    %1207 = vmatprep.subr.mxu0 0.0
    %1208 = vmatpush1.msra.mxu0 0.0
    %1209 = vmatprep.subr.mxu0 0.0
    %1210 = vmatpush1.msra.mxu0 0.0
    %1211 = vmatprep.subr.mxu0 0.0
    %1212 = vmatpush1.msra.mxu0 0.0
    %1213 = vmatprep.subr.mxu0 0.0
    %1214 = vmatpush1.msra.mxu0 0.0
    %1215 = vmatprep.subr.mxu0 0.0
    %1216 = vmatpush1.msra.mxu0 0.0
    %1217 = vmatprep.subr.mxu0 0.0
    %1218 = vmatpush1.msra.mxu0 0.0
    %1219 = vmatprep.subr.mxu0 0.0
    %1220 = vmatpush1.msra.mxu0 0.0
    %1221 = vmatprep.subr.mxu0 0.0
    %1222 = vmatpush1.msra.mxu0 0.0
    %1223 = vmatprep.subr.mxu0 0.0
    %1224 = vmatpush1.msra.mxu0 0.0
    %1225 = vmatprep.subr.mxu0 0.0
    %1226 = vmatpush1.msra.mxu0 0.0
    %1227 = vmatprep.subr.mxu0 0.0
    %1228 = vmatpush1.msra.mxu0 0.0
    %1229 = vmatprep.mubr.f32.mxu0 0.0
    %1230 = vmatmul.mubr.f32.gmra.mrb[0].mxu0 %v1162
    %v1231 = vpop.f32.mrb[0].mxu0
    %v1232 = vadd.f32 %v141, %v1231
    %v1233 = vpop.f32.mrb[0].mxu0
    %1234 = vdwg.mxu0
    %1235 = vst [vmem:[#allocation2] sm:$0x3] %v1232
    // Predicated region
    $region26: #{mdlrnn_forward.1} parent=1 // pred_check
      _
    $region27: #{mdlrnn_forward.1} parent=1 // pred_check_branch
      %1237 = sbr.rel (0) target = $region29
    $region28: #{mdlrnn_forward.1} parent=1 // pred_region
      _
    $region29: #{mdlrnn_forward.1} parent=1 // pred_fallthru
      _
    // Predicated region
    $region30: #{mdlrnn_forward.1} parent=1 // pred_check
      _
    $region31: #{mdlrnn_forward.1} parent=1 // pred_check_branch
      %1239 = sbr.rel (0) target = $region33
    $region32: #{mdlrnn_forward.1} parent=1 // pred_region
      %s1241 = ssub.s32 32, 32
      %1242 = vsyncadd [#allocation3], %s1241
      %s1244 = sshll.u32 [#allocation2], 4
      %s1245 = int_to_ptr.vmem [resolvable:$true] %s1244
      %1247 = dma.vmem_to_hbm [thread:$0]  %s1245, 32, %s6, [#allocation3]
    $region33: #{mdlrnn_forward.1} parent=1 // pred_fallthru
      _
    // Predicated region
    $region34: #{mdlrnn_forward.1} parent=1 // pred_check
      _
    $region35: #{mdlrnn_forward.1} parent=1 // pred_check_branch
      %1249 = sbr.rel (0) target = $region37
    $region36: #{mdlrnn_forward.1} parent=1 // pred_region
      _
    $region37: #{mdlrnn_forward.1} parent=1 // pred_fallthru
      _
    // Predicated region
    $region38: #{mdlrnn_forward.1} parent=1 // pred_check
      _
    $region39: #{mdlrnn_forward.1} parent=1 // pred_check_branch
      %1251 = sbr.rel (0) target = $region41
    $region40: #{mdlrnn_forward.1} parent=1 // pred_region
      %1252 = dma.done [#allocation3], 32
    $region41: #{mdlrnn_forward.1} parent=1 // pred_fallthru
      _
    %1253 = vsyncpa [#allocation3], 1

</llo_original>
